<compile_context>
chip_gen: v6e
topology: v6e:2x2x1
jax: 0.10.0
libtpu: 0.0.40
codegen_flags: <defaults>
</compile_context>

<pallas_src>
import jax
import jax.numpy as jnp
from jax import lax
from jax.experimental import pallas as pl
from jax.experimental.pallas import tpu as pltpu

# ----------------- config (small synthetic DeepSeek ModelArgs) -----------------
DIM = 32
INTER_DIM = 64
N_HEADS = 2
QK_NOPE_HEAD_DIM = 16
QK_ROPE_HEAD_DIM = 8
QK_HEAD_DIM = QK_NOPE_HEAD_DIM + QK_ROPE_HEAD_DIM        # 24
HALF_ROPE = QK_ROPE_HEAD_DIM // 2                        # 4
V_HEAD_DIM = 16
KV_LORA_RANK = 16
KV_B_OUT = QK_NOPE_HEAD_DIM + V_HEAD_DIM                 # 32 per head
Q_COLS = N_HEADS * QK_HEAD_DIM                           # 48
QKV_COLS = Q_COLS + KV_LORA_RANK + QK_ROPE_HEAD_DIM      # 72
EPS = 1e-6
ROPE_THETA = 10000.0
NEG_BIG = -1e30


# ----------------- fused Pallas kernel -----------------

def _rms_scale(x):
    # rsqrt(mean(x^2)+eps); the learned gain is folded into the downstream weights at prep time.
    return x * lax.rsqrt(jnp.mean(x * x, axis=-1, keepdims=True) + EPS)


def _rope_halves(x, cos, sin):
    # x is in half-split order: [re_0..re_{H-1}, im_0..im_{H-1}]
    x1 = x[:, :HALF_ROPE]
    x2 = x[:, HALF_ROPE:]
    return x1 * cos - x2 * sin, x1 * sin + x2 * cos


def _dot_t(a, b):
    # a: (M, K), b: (N, K) -> (M, N), contraction over the trailing dim (MXU).
    return lax.dot_general(a, b, (((1,), (1,)), ((), ())),
                           preferred_element_type=jnp.float32)


def _block_kernel(x_ref, cs_ref, wqkv_ref, wkvb_ref, wo_ref, w13_ref, w2_ref, o_ref):
    x = x_ref[...].astype(jnp.float32)                      # (S, DIM) -- one batch
    s_len = x.shape[0]
    cos = cs_ref[:, :HALF_ROPE].astype(jnp.float32)         # (S, HALF_ROPE)
    sin = cs_ref[:, HALF_ROPE:].astype(jnp.float32)

    # ---------- attention branch ----------
    xh = _rms_scale(x)                                      # attn_norm gain folded into wqkv rows
    qkv = jnp.dot(xh, wqkv_ref[...], preferred_element_type=jnp.float32)   # (S, 72)
    q = qkv[:, :Q_COLS]                                     # softmax scale already folded in
    kv_c = qkv[:, Q_COLS:Q_COLS + KV_LORA_RANK]
    k_pe = qkv[:, Q_COLS + KV_LORA_RANK:]
    k_r1, k_r2 = _rope_halves(k_pe, cos, sin)               # shared across heads

    kvh = _rms_scale(kv_c)                                  # kv_norm gain folded into wkv_b rows
    kvb = jnp.dot(kvh, wkvb_ref[...], preferred_element_type=jnp.float32)  # (S, H*32)

    # causal mask, generated in-kernel (per-batch block handled by the grid).
    row = lax.broadcasted_iota(jnp.int32, (s_len, s_len), 0)
    col = lax.broadcasted_iota(jnp.int32, (s_len, s_len), 1)
    allowed = col <= row

    heads = []
    for hd in range(N_HEADS):                               # static unroll (N_HEADS = 2)
        qb = hd * QK_HEAD_DIM
        q_nope = q[:, qb:qb + QK_NOPE_HEAD_DIM]
        q_r1, q_r2 = _rope_halves(q[:, qb + QK_NOPE_HEAD_DIM:qb + QK_HEAD_DIM], cos, sin)
        q_full = jnp.concatenate([q_nope, q_r1, q_r2], axis=-1)           # (S, 24)

        kb = hd * KV_B_OUT
        k_nope = kvb[:, kb:kb + QK_NOPE_HEAD_DIM]
        v = kvb[:, kb + QK_NOPE_HEAD_DIM:kb + KV_B_OUT]
        k_full = jnp.concatenate([k_nope, k_r1, k_r2], axis=-1)           # (S, 24)

        s = _dot_t(q_full, k_full)                          # single fused score matmul (K=24)
        s = jnp.where(allowed, s, NEG_BIG)
        s = s - jnp.max(s, axis=-1, keepdims=True)
        p = jnp.exp(s)
        p = p / jnp.sum(p, axis=-1, keepdims=True)          # exact softmax normalization
        heads.append(jnp.dot(p, v, preferred_element_type=jnp.float32))   # (S, Dv)

    o_cat = jnp.concatenate(heads, axis=-1)                 # (S, H*Dv) = (S, 32)
    attn_out = jnp.dot(o_cat, wo_ref[...], preferred_element_type=jnp.float32)
    x1 = x + attn_out

    # ---------- gated MLP branch ----------
    x1h = _rms_scale(x1)                                    # ffn_norm gain folded into w13 rows
    h13 = jnp.dot(x1h, w13_ref[...], preferred_element_type=jnp.float32)  # (S, 128) lane-dense
    g = h13[:, :INTER_DIM]
    u = h13[:, INTER_DIM:]
    act = g * jax.nn.sigmoid(g) * u                         # silu(w1 x) * (w3 x)
    ffn_out = jnp.dot(act, w2_ref[...], preferred_element_type=jnp.float32)

    o_ref[...] = (x1 + ffn_out).astype(o_ref.dtype)


def block_forward(prep, x, start_pos, freqs_cis, mask=None):
    """Fused Block forward (prefill path). `prep` comes from prepare_block_params()."""
    # TODO(synk): start_pos > 0 incremental decode (KV-cache update/read) is not implemented;
    # the causal mask is generated in-kernel so the `mask` argument is unused.
    del mask, start_pos
    B, S, _ = x.shape
    cos_sin = jnp.concatenate(
        [jnp.real(freqs_cis), jnp.imag(freqs_cis)], axis=-1).astype(jnp.float32)   # (S, 8)

    def rep(shape):
        zeros = (0,) * len(shape)
        return pl.BlockSpec(shape, lambda b, _z=zeros: _z)

    out2d = pl.pallas_call(
        _block_kernel,
        out_shape=jax.ShapeDtypeStruct((B * S, DIM), x.dtype),
        grid=(B,),
        in_specs=[
            pl.BlockSpec((S, DIM), lambda b: (b, 0)),       # x rows of batch b
            rep((S, 2 * HALF_ROPE)),                        # cos|sin (shared across batches)
            rep((DIM, QKV_COLS)),                           # wq|wkv_a (norm+scale folded, rope perm)
            rep((KV_LORA_RANK, N_HEADS * KV_B_OUT)),        # wkv_b (kv_norm folded)
            rep((N_HEADS * V_HEAD_DIM, DIM)),               # wo (single 2-D GEMM)
            rep((DIM, 2 * INTER_DIM)),                      # w1|w3 packed, lane-dense 128, ffn_norm folded
            rep((INTER_DIM, DIM)),                          # w2
        ],
        out_specs=pl.BlockSpec((S, DIM), lambda b: (b, 0)),
        compiler_params=pltpu.CompilerParams(dimension_semantics=("parallel",)),
    )(x.reshape(B * S, DIM), cos_sin,
      prep["w_qkv"], prep["wkv_b"], prep["wo"], prep["w13"], prep["w2"])
    return out2d.reshape(B, S, DIM)


# ----------------- one-time parameter re-layout -----------------

def prepare_block_params(p):
    """Re-layout torch-equivalent Block weights for the fused kernel (done once)."""
    scale = QK_HEAD_DIM ** -0.5
    # interleaved (re, im) pairs -> half-split [re..., im...]
    perm = jnp.array([2 * i for i in range(HALF_ROPE)] +
                     [2 * i + 1 for i in range(HALF_ROPE)], dtype=jnp.int32)

    wq = p["wq"]                                            # (DIM, H*(nope+rope))
    cols = []
    for hd in range(N_HEADS):
        base = hd * QK_HEAD_DIM
        cols.append(wq[:, base:base + QK_NOPE_HEAD_DIM])
        cols.append(wq[:, base + QK_NOPE_HEAD_DIM:base + QK_HEAD_DIM][:, perm])
    wq_prep = jnp.concatenate(cols, axis=1) * scale         # fold softmax scale into q columns

    wkv_a = p["wkv_a"]
    wkv_a_prep = jnp.concatenate(
        [wkv_a[:, :KV_LORA_RANK], wkv_a[:, KV_LORA_RANK:][:, perm]], axis=1)

    # single q|kv_a projection; fold attn_norm gain into its rows (exact: residual uses raw x).
    w_qkv = jnp.concatenate([wq_prep, wkv_a_prep], axis=1) * p["attn_norm"][:, None]

    return {
        "w_qkv": w_qkv,                                              # (DIM, 72)
        "wkv_b": p["wkv_b"] * p["kv_norm"][:, None],                 # kv_norm folded into rows
        "wo": p["wo"],                                               # (H*Dv, DIM), single GEMM
        "w13": jnp.concatenate([p["w1"], p["w3"]], axis=1) * p["ffn_norm"][:, None],  # (DIM, 128)
        "w2": p["w2"],
    }


# ----------------- RoPE table & deterministic init -----------------

def precompute_freqs_cis(seqlen, rope_dim, theta=ROPE_THETA):
    freqs = 1.0 / (theta ** (jnp.arange(0, rope_dim, 2, dtype=jnp.float32) / rope_dim))
    t = jnp.arange(seqlen, dtype=jnp.float32)
    ang = jnp.outer(t, freqs)                               # (S, rope_dim//2)
    return jax.lax.complex(jnp.cos(ang), jnp.sin(ang))      # like torch.polar


def init_params(key):
    ks = jax.random.split(key, 10)

    def w(k, shape):
        return jax.random.normal(k, shape, dtype=jnp.float32) * (shape[0] ** -0.5)

    def gain(k, n):
        return 1.0 + 0.1 * jax.random.normal(k, (n,), dtype=jnp.float32)

    return {
        "attn_norm": gain(ks[7], DIM),
        "ffn_norm": gain(ks[8], DIM),
        "kv_norm": gain(ks[9], KV_LORA_RANK),
        "wq": w(ks[0], (DIM, N_HEADS * QK_HEAD_DIM)),
        "wkv_a": w(ks[1], (DIM, KV_LORA_RANK + QK_ROPE_HEAD_DIM)),
        "wkv_b": w(ks[2], (KV_LORA_RANK, N_HEADS * KV_B_OUT)),
        "wo": w(ks[3], (N_HEADS * V_HEAD_DIM, DIM)),
        "w1": w(ks[4], (DIM, INTER_DIM)),
        "w2": w(ks[5], (INTER_DIM, DIM)),
        "w3": w(ks[6], (DIM, INTER_DIM)),
    }


# ----------------- pure-JAX reference (torch-equivalent semantics, HIGHEST precision) -----------------

_HP = jax.lax.Precision.HIGHEST


def _mm(a, b):
    return jnp.dot(a, b, precision=_HP)


def _apply_rotary_emb_ref(x, freqs_cis):
    B, S, H, D = x.shape
    xr = x.reshape(B, S, H, D // 2, 2)
    x0, x1 = xr[..., 0], xr[..., 1]
    cos = jnp.real(freqs_cis).reshape(1, S, 1, D // 2)
    sin = jnp.imag(freqs_cis).reshape(1, S, 1, D // 2)
    y0 = x0 * cos - x1 * sin
    y1 = x0 * sin + x1 * cos
    return jnp.stack([y0, y1], axis=-1).reshape(B, S, H, D)


def block_forward_ref(p, x, start_pos, freqs_cis, mask):
    B, S, _ = x.shape

    def rmsnorm(v, w):
        return v * lax.rsqrt(jnp.mean(v * v, -1, keepdims=True) + EPS) * w

    h = rmsnorm(x, p["attn_norm"]).reshape(B * S, DIM)
    q = _mm(h, p["wq"]).reshape(B, S, N_HEADS, QK_HEAD_DIM)
    q_nope, q_pe = q[..., :QK_NOPE_HEAD_DIM], q[..., QK_NOPE_HEAD_DIM:]
    q_pe = _apply_rotary_emb_ref(q_pe, freqs_cis)
    kv = _mm(h, p["wkv_a"])
    kv_c = kv[:, :KV_LORA_RANK]
    k_pe = _apply_rotary_emb_ref(kv[:, KV_LORA_RANK:].reshape(B, S, 1, QK_ROPE_HEAD_DIM),
                                 freqs_cis)
    kvb = _mm(rmsnorm(kv_c, p["kv_norm"]), p["wkv_b"]).reshape(B, S, N_HEADS, KV_B_OUT)
    k_nope, v = kvb[..., :QK_NOPE_HEAD_DIM], kvb[..., QK_NOPE_HEAD_DIM:]
    qf = jnp.concatenate([q_nope, q_pe], -1)
    kf = jnp.concatenate(
        [k_nope, jnp.broadcast_to(k_pe, (B, S, N_HEADS, QK_ROPE_HEAD_DIM))], -1)
    scores = (jnp.einsum("bshd,bthd->bhst", qf, kf, precision=_HP)
              * (QK_HEAD_DIM ** -0.5) + mask[None, None])
    probs = jax.nn.softmax(scores, axis=-1)
    o = jnp.einsum("bhst,bthd->bshd", probs, v,
                   precision=_HP).reshape(B * S, N_HEADS * V_HEAD_DIM)
    x = x + _mm(o, p["wo"]).reshape(B, S, DIM)
    h2 = rmsnorm(x, p["ffn_norm"])
    ffn = _mm(jax.nn.silu(_mm(h2, p["w1"])) * _mm(h2, p["w3"]), p["w2"])
    return x + ffn


# ----------------- main -----------------

if __name__ == "__main__":
    key = jax.random.PRNGKey(0)
    pkey, xkey = jax.random.split(key)
    params = init_params(pkey)
    prep = prepare_block_params(params)          # one-time weight re-layout

    B, S = 2, 8
    x = jax.random.normal(xkey, (B, S, DIM), dtype=jnp.float32)
    start_pos = 0
    freqs_cis = precompute_freqs_cis(S, QK_ROPE_HEAD_DIM)
    # reference-style causal additive mask (the fused kernel builds its own mask in-kernel)
    mask = jnp.triu(jnp.full((S, S), float("-inf"), dtype=jnp.float32), k=1)

    fwd = jax.jit(block_forward, static_argnums=(2,))
    out = fwd(prep, x, start_pos, freqs_cis, mask)
    jax.block_until_ready(out)

    assert out.shape == (B, S, DIM) and out.dtype == jnp.float32
    assert bool(jnp.all(jnp.isfinite(out)))

    ref = block_forward_ref(params, x, start_pos, freqs_cis, mask)
    max_err = float(jnp.max(jnp.abs(out - ref)))
    assert bool(jnp.allclose(out, ref, rtol=3e-2, atol=5e-2)), (
        f"kernel/reference mismatch, max abs err = {max_err:.3e}")

    print("KERNEL_OK")
</pallas_src>

<mosaic_0001>
module attributes {stable_mosaic.version = 11 : i64} {
  func.func @_block_kernel(%arg0: i32, %arg1: memref<8x32xf32, #tpu.memory_space<vmem>>, %arg2: memref<8x8xf32, #tpu.memory_space<vmem>>, %arg3: memref<32x72xf32, #tpu.memory_space<vmem>>, %arg4: memref<16x64xf32, #tpu.memory_space<vmem>>, %arg5: memref<32x32xf32, #tpu.memory_space<vmem>>, %arg6: memref<32x128xf32, #tpu.memory_space<vmem>>, %arg7: memref<64x32xf32, #tpu.memory_space<vmem>>, %arg8: memref<8x32xf32, #tpu.memory_space<vmem>>) attributes {dimension_semantics = [#tpu.dimension_semantics<parallel>], iteration_bounds = array<i64: 2>, scalar_prefetch = 0 : i64, scratch_operands = 0 : i64, tpu.core_type = #tpu.core_type<tc>, window_params = [{transform_indices = @transform_0, window_bounds = array<i64: 8, 32>}, {pipeline_mode = #tpu.pipeline_mode<synchronous>, transform_indices = @transform_1, window_bounds = array<i64: 8, 8>}, {pipeline_mode = #tpu.pipeline_mode<synchronous>, transform_indices = @transform_2, window_bounds = array<i64: 32, 72>}, {pipeline_mode = #tpu.pipeline_mode<synchronous>, transform_indices = @transform_3, window_bounds = array<i64: 16, 64>}, {pipeline_mode = #tpu.pipeline_mode<synchronous>, transform_indices = @transform_4, window_bounds = array<i64: 32, 32>}, {pipeline_mode = #tpu.pipeline_mode<synchronous>, transform_indices = @transform_5, window_bounds = array<i64: 32, 128>}, {pipeline_mode = #tpu.pipeline_mode<synchronous>, transform_indices = @transform_6, window_bounds = array<i64: 64, 32>}, {transform_indices = @transform_7, window_bounds = array<i64: 8, 32>}]} {
    %c0 = arith.constant 0 : index
    %c0_0 = arith.constant 0 : index
    %0 = vector.load %arg1[%c0, %c0_0] : memref<8x32xf32, #tpu.memory_space<vmem>>, vector<8x32xf32>
    %c0_1 = arith.constant 0 : index
    %c0_2 = arith.constant 0 : index
    %1 = vector.load %arg2[%c0_1, %c0_2] : memref<8x8xf32, #tpu.memory_space<vmem>>, vector<8x4xf32>
    %c0_3 = arith.constant 0 : index
    %c4 = arith.constant 4 : index
    %2 = vector.load %arg2[%c0_3, %c4] : memref<8x8xf32, #tpu.memory_space<vmem>>, vector<8x4xf32>
    %3 = arith.mulf %0, %0 : vector<8x32xf32>
    %cst = arith.constant dense<0.000000e+00> : vector<8xf32>
    %4 = vector.multi_reduction <add>, %3, %cst [1] : vector<8x32xf32> to vector<8xf32>
    %5 = vector.shape_cast %4 : vector<8xf32> to vector<8x1xf32>
    %cst_4 = arith.constant 3.200000e+01 : f32
    %6 = vector.broadcast %cst_4 : f32 to vector<8x1xf32>
    %7 = arith.divf %5, %6 : vector<8x1xf32>
    %cst_5 = arith.constant 9.99999997E-7 : f32
    %8 = vector.broadcast %cst_5 : f32 to vector<8x1xf32>
    %9 = arith.addf %7, %8 : vector<8x1xf32>
    %10 = math.rsqrt %9 : vector<8x1xf32>
    %11 = vector.broadcast %10 : vector<8x1xf32> to vector<8x32xf32>
    %12 = arith.mulf %0, %11 : vector<8x32xf32>
    %c0_6 = arith.constant 0 : index
    %c0_7 = arith.constant 0 : index
    %13 = vector.load %arg3[%c0_6, %c0_7] : memref<32x72xf32, #tpu.memory_space<vmem>>, vector<32x72xf32>
    %cst_8 = arith.constant dense<0.000000e+00> : vector<8x72xf32>
    %14 = tpu.matmul %12, %13, %cst_8 {dimension_numbers = #tpu.dot_dimension_numbers<[1], [0], [0], [1], [0, 0, 1, 1], [], []>} : vector<8x32xf32>, vector<32x72xf32>, vector<8x72xf32> -> vector<8x72xf32>
    %15 = vector.extract_strided_slice %14 {offsets = [0, 0], sizes = [8, 48], strides = [1, 1]} : vector<8x72xf32> to vector<8x48xf32>
    %16 = vector.extract_strided_slice %14 {offsets = [0, 48], sizes = [8, 16], strides = [1, 1]} : vector<8x72xf32> to vector<8x16xf32>
    %17 = vector.extract_strided_slice %14 {offsets = [0, 64], sizes = [8, 8], strides = [1, 1]} : vector<8x72xf32> to vector<8x8xf32>
    %18 = vector.extract_strided_slice %17 {offsets = [0, 0], sizes = [8, 4], strides = [1, 1]} : vector<8x8xf32> to vector<8x4xf32>
    %19 = vector.extract_strided_slice %17 {offsets = [0, 4], sizes = [8, 4], strides = [1, 1]} : vector<8x8xf32> to vector<8x4xf32>
    %20 = arith.mulf %18, %1 : vector<8x4xf32>
    %21 = arith.mulf %19, %2 : vector<8x4xf32>
    %22 = arith.subf %20, %21 : vector<8x4xf32>
    %23 = arith.mulf %18, %2 : vector<8x4xf32>
    %24 = arith.mulf %19, %1 : vector<8x4xf32>
    %25 = arith.addf %23, %24 : vector<8x4xf32>
    %26 = arith.mulf %16, %16 : vector<8x16xf32>
    %cst_9 = arith.constant dense<0.000000e+00> : vector<8xf32>
    %27 = vector.multi_reduction <add>, %26, %cst_9 [1] : vector<8x16xf32> to vector<8xf32>
    %28 = vector.shape_cast %27 : vector<8xf32> to vector<8x1xf32>
    %cst_10 = arith.constant 1.600000e+01 : f32
    %29 = vector.broadcast %cst_10 : f32 to vector<8x1xf32>
    %30 = arith.divf %28, %29 : vector<8x1xf32>
    %cst_11 = arith.constant 9.99999997E-7 : f32
    %31 = vector.broadcast %cst_11 : f32 to vector<8x1xf32>
    %32 = arith.addf %30, %31 : vector<8x1xf32>
    %33 = math.rsqrt %32 : vector<8x1xf32>
    %34 = vector.broadcast %33 : vector<8x1xf32> to vector<8x16xf32>
    %35 = arith.mulf %16, %34 : vector<8x16xf32>
    %c0_12 = arith.constant 0 : index
    %c0_13 = arith.constant 0 : index
    %36 = vector.load %arg4[%c0_12, %c0_13] : memref<16x64xf32, #tpu.memory_space<vmem>>, vector<16x64xf32>
    %cst_14 = arith.constant dense<0.000000e+00> : vector<8x64xf32>
    %37 = tpu.matmul %35, %36, %cst_14 {dimension_numbers = #tpu.dot_dimension_numbers<[1], [0], [0], [1], [0, 0, 1, 1], [], []>} : vector<8x16xf32>, vector<16x64xf32>, vector<8x64xf32> -> vector<8x64xf32>
    %38 = tpu.iota {dimensions = array<i32: 0>} : vector<8x8xi32>
    %39 = tpu.iota {dimensions = array<i32: 1>} : vector<8x8xi32>
    %40 = arith.cmpi sle, %39, %38 : vector<8x8xi32>
    %41 = vector.extract_strided_slice %15 {offsets = [0, 0], sizes = [8, 16], strides = [1, 1]} : vector<8x48xf32> to vector<8x16xf32>
    %42 = vector.extract_strided_slice %15 {offsets = [0, 16], sizes = [8, 8], strides = [1, 1]} : vector<8x48xf32> to vector<8x8xf32>
    %43 = vector.extract_strided_slice %42 {offsets = [0, 0], sizes = [8, 4], strides = [1, 1]} : vector<8x8xf32> to vector<8x4xf32>
    %44 = vector.extract_strided_slice %42 {offsets = [0, 4], sizes = [8, 4], strides = [1, 1]} : vector<8x8xf32> to vector<8x4xf32>
    %45 = arith.mulf %43, %1 : vector<8x4xf32>
    %46 = arith.mulf %44, %2 : vector<8x4xf32>
    %47 = arith.subf %45, %46 : vector<8x4xf32>
    %48 = arith.mulf %43, %2 : vector<8x4xf32>
    %49 = arith.mulf %44, %1 : vector<8x4xf32>
    %50 = arith.addf %48, %49 : vector<8x4xf32>
    %51 = tpu.concatenate %41, %47, %50 in 1 : vector<8x16xf32>, vector<8x4xf32>, vector<8x4xf32> -> vector<8x24xf32>
    %52 = vector.extract_strided_slice %37 {offsets = [0, 0], sizes = [8, 16], strides = [1, 1]} : vector<8x64xf32> to vector<8x16xf32>
    %53 = vector.extract_strided_slice %37 {offsets = [0, 16], sizes = [8, 16], strides = [1, 1]} : vector<8x64xf32> to vector<8x16xf32>
    %54 = tpu.concatenate %52, %22, %25 in 1 : vector<8x16xf32>, vector<8x4xf32>, vector<8x4xf32> -> vector<8x24xf32>
    %cst_15 = arith.constant dense<0.000000e+00> : vector<8x8xf32>
    %55 = tpu.matmul %51, %54, %cst_15 {dimension_numbers = #tpu.dot_dimension_numbers<[1], [1], [0], [0], [0, 0, 1, 0], [], []>} : vector<8x24xf32>, vector<8x24xf32>, vector<8x8xf32> -> vector<8x8xf32>
    %cst_16 = arith.constant -1.000000e+30 : f32
    %56 = vector.broadcast %cst_16 : f32 to vector<8x8xf32>
    %57 = arith.select %40, %55, %56 : vector<8x8xi1>, vector<8x8xf32>
    %cst_17 = arith.constant dense<0xFF800000> : vector<8xf32>
    %58 = vector.multi_reduction <maximumf>, %57, %cst_17 [1] : vector<8x8xf32> to vector<8xf32>
    %59 = vector.shape_cast %58 : vector<8xf32> to vector<8x1xf32>
    %60 = vector.broadcast %59 : vector<8x1xf32> to vector<8x8xf32>
    %61 = arith.subf %57, %60 : vector<8x8xf32>
    %62 = math.exp %61 : vector<8x8xf32>
    %cst_18 = arith.constant dense<0.000000e+00> : vector<8xf32>
    %63 = vector.multi_reduction <add>, %62, %cst_18 [1] : vector<8x8xf32> to vector<8xf32>
    %64 = vector.shape_cast %63 : vector<8xf32> to vector<8x1xf32>
    %65 = vector.broadcast %64 : vector<8x1xf32> to vector<8x8xf32>
    %66 = arith.divf %62, %65 : vector<8x8xf32>
    %cst_19 = arith.constant dense<0.000000e+00> : vector<8x16xf32>
    %67 = tpu.matmul %66, %53, %cst_19 {dimension_numbers = #tpu.dot_dimension_numbers<[1], [0], [0], [1], [0, 0, 1, 1], [], []>} : vector<8x8xf32>, vector<8x16xf32>, vector<8x16xf32> -> vector<8x16xf32>
    %68 = vector.extract_strided_slice %15 {offsets = [0, 24], sizes = [8, 16], strides = [1, 1]} : vector<8x48xf32> to vector<8x16xf32>
    %69 = vector.extract_strided_slice %15 {offsets = [0, 40], sizes = [8, 8], strides = [1, 1]} : vector<8x48xf32> to vector<8x8xf32>
    %70 = vector.extract_strided_slice %69 {offsets = [0, 0], sizes = [8, 4], strides = [1, 1]} : vector<8x8xf32> to vector<8x4xf32>
    %71 = vector.extract_strided_slice %69 {offsets = [0, 4], sizes = [8, 4], strides = [1, 1]} : vector<8x8xf32> to vector<8x4xf32>
    %72 = arith.mulf %70, %1 : vector<8x4xf32>
    %73 = arith.mulf %71, %2 : vector<8x4xf32>
    %74 = arith.subf %72, %73 : vector<8x4xf32>
    %75 = arith.mulf %70, %2 : vector<8x4xf32>
    %76 = arith.mulf %71, %1 : vector<8x4xf32>
    %77 = arith.addf %75, %76 : vector<8x4xf32>
    %78 = tpu.concatenate %68, %74, %77 in 1 : vector<8x16xf32>, vector<8x4xf32>, vector<8x4xf32> -> vector<8x24xf32>
    %79 = vector.extract_strided_slice %37 {offsets = [0, 32], sizes = [8, 16], strides = [1, 1]} : vector<8x64xf32> to vector<8x16xf32>
    %80 = vector.extract_strided_slice %37 {offsets = [0, 48], sizes = [8, 16], strides = [1, 1]} : vector<8x64xf32> to vector<8x16xf32>
    %81 = tpu.concatenate %79, %22, %25 in 1 : vector<8x16xf32>, vector<8x4xf32>, vector<8x4xf32> -> vector<8x24xf32>
    %cst_20 = arith.constant dense<0.000000e+00> : vector<8x8xf32>
    %82 = tpu.matmul %78, %81, %cst_20 {dimension_numbers = #tpu.dot_dimension_numbers<[1], [1], [0], [0], [0, 0, 1, 0], [], []>} : vector<8x24xf32>, vector<8x24xf32>, vector<8x8xf32> -> vector<8x8xf32>
    %cst_21 = arith.constant -1.000000e+30 : f32
    %83 = vector.broadcast %cst_21 : f32 to vector<8x8xf32>
    %84 = arith.select %40, %82, %83 : vector<8x8xi1>, vector<8x8xf32>
    %cst_22 = arith.constant dense<0xFF800000> : vector<8xf32>
    %85 = vector.multi_reduction <maximumf>, %84, %cst_22 [1] : vector<8x8xf32> to vector<8xf32>
    %86 = vector.shape_cast %85 : vector<8xf32> to vector<8x1xf32>
    %87 = vector.broadcast %86 : vector<8x1xf32> to vector<8x8xf32>
    %88 = arith.subf %84, %87 : vector<8x8xf32>
    %89 = math.exp %88 : vector<8x8xf32>
    %cst_23 = arith.constant dense<0.000000e+00> : vector<8xf32>
    %90 = vector.multi_reduction <add>, %89, %cst_23 [1] : vector<8x8xf32> to vector<8xf32>
    %91 = vector.shape_cast %90 : vector<8xf32> to vector<8x1xf32>
    %92 = vector.broadcast %91 : vector<8x1xf32> to vector<8x8xf32>
    %93 = arith.divf %89, %92 : vector<8x8xf32>
    %cst_24 = arith.constant dense<0.000000e+00> : vector<8x16xf32>
    %94 = tpu.matmul %93, %80, %cst_24 {dimension_numbers = #tpu.dot_dimension_numbers<[1], [0], [0], [1], [0, 0, 1, 1], [], []>} : vector<8x8xf32>, vector<8x16xf32>, vector<8x16xf32> -> vector<8x16xf32>
    %95 = tpu.concatenate %67, %94 in 1 : vector<8x16xf32>, vector<8x16xf32> -> vector<8x32xf32>
    %c0_25 = arith.constant 0 : index
    %c0_26 = arith.constant 0 : index
    %96 = vector.load %arg5[%c0_25, %c0_26] : memref<32x32xf32, #tpu.memory_space<vmem>>, vector<32x32xf32>
    %cst_27 = arith.constant dense<0.000000e+00> : vector<8x32xf32>
    %97 = tpu.matmul %95, %96, %cst_27 {dimension_numbers = #tpu.dot_dimension_numbers<[1], [0], [0], [1], [0, 0, 1, 1], [], []>} : vector<8x32xf32>, vector<32x32xf32>, vector<8x32xf32> -> vector<8x32xf32>
    %98 = arith.addf %0, %97 : vector<8x32xf32>
    %99 = arith.mulf %98, %98 : vector<8x32xf32>
    %cst_28 = arith.constant dense<0.000000e+00> : vector<8xf32>
    %100 = vector.multi_reduction <add>, %99, %cst_28 [1] : vector<8x32xf32> to vector<8xf32>
    %101 = vector.shape_cast %100 : vector<8xf32> to vector<8x1xf32>
    %cst_29 = arith.constant 3.200000e+01 : f32
    %102 = vector.broadcast %cst_29 : f32 to vector<8x1xf32>
    %103 = arith.divf %101, %102 : vector<8x1xf32>
    %cst_30 = arith.constant 9.99999997E-7 : f32
    %104 = vector.broadcast %cst_30 : f32 to vector<8x1xf32>
    %105 = arith.addf %103, %104 : vector<8x1xf32>
    %106 = math.rsqrt %105 : vector<8x1xf32>
    %107 = vector.broadcast %106 : vector<8x1xf32> to vector<8x32xf32>
    %108 = arith.mulf %98, %107 : vector<8x32xf32>
    %c0_31 = arith.constant 0 : index
    %c0_32 = arith.constant 0 : index
    %109 = vector.load %arg6[%c0_31, %c0_32] : memref<32x128xf32, #tpu.memory_space<vmem>>, vector<32x128xf32>
    %cst_33 = arith.constant dense<0.000000e+00> : vector<8x128xf32>
    %110 = tpu.matmul %108, %109, %cst_33 {dimension_numbers = #tpu.dot_dimension_numbers<[1], [0], [0], [1], [0, 0, 1, 1], [], []>} : vector<8x32xf32>, vector<32x128xf32>, vector<8x128xf32> -> vector<8x128xf32>
    %111 = vector.extract_strided_slice %110 {offsets = [0, 0], sizes = [8, 64], strides = [1, 1]} : vector<8x128xf32> to vector<8x64xf32>
    %112 = vector.extract_strided_slice %110 {offsets = [0, 64], sizes = [8, 64], strides = [1, 1]} : vector<8x128xf32> to vector<8x64xf32>
    %113 = arith.negf %111 : vector<8x64xf32>
    %114 = math.exp %113 : vector<8x64xf32>
    %cst_34 = arith.constant 1.000000e+00 : f32
    %115 = vector.broadcast %cst_34 : f32 to vector<8x64xf32>
    %116 = arith.addf %115, %114 : vector<8x64xf32>
    %117 = arith.divf %115, %116 : vector<8x64xf32>
    %118 = arith.mulf %111, %117 : vector<8x64xf32>
    %119 = arith.mulf %118, %112 : vector<8x64xf32>
    %c0_35 = arith.constant 0 : index
    %c0_36 = arith.constant 0 : index
    %120 = vector.load %arg7[%c0_35, %c0_36] : memref<64x32xf32, #tpu.memory_space<vmem>>, vector<64x32xf32>
    %cst_37 = arith.constant dense<0.000000e+00> : vector<8x32xf32>
    %121 = tpu.matmul %119, %120, %cst_37 {dimension_numbers = #tpu.dot_dimension_numbers<[1], [0], [0], [1], [0, 0, 1, 1], [], []>} : vector<8x64xf32>, vector<64x32xf32>, vector<8x32xf32> -> vector<8x32xf32>
    %122 = arith.addf %98, %121 : vector<8x32xf32>
    %c0_38 = arith.constant 0 : index
    %c0_39 = arith.constant 0 : index
    %123 = vector.load %arg8[%c0_38, %c0_39] : memref<8x32xf32, #tpu.memory_space<vmem>>, vector<8x32xf32>
    tpu.vector_store %arg8[%c0_38, %c0_39], %122 {strides = array<i32>} : memref<8x32xf32, #tpu.memory_space<vmem>>, vector<8x32xf32>,
    return
  }
  func.func @transform_0(%arg0: i32) -> (i32, i32) {
    %c0_i32 = arith.constant 0 : i32
    %c0_i32_0 = arith.constant 0 : i32
    return %arg0, %c0_i32 : i32, i32
  }
  func.func @transform_1(%arg0: i32) -> (i32, i32) {
    %c0_i32 = arith.constant 0 : i32
    %c0_i32_0 = arith.constant 0 : i32
    %c0_i32_1 = arith.constant 0 : i32
    return %c0_i32, %c0_i32_0 : i32, i32
  }
  func.func @transform_2(%arg0: i32) -> (i32, i32) {
    %c0_i32 = arith.constant 0 : i32
    %c0_i32_0 = arith.constant 0 : i32
    %c0_i32_1 = arith.constant 0 : i32
    return %c0_i32, %c0_i32_0 : i32, i32
  }
  func.func @transform_3(%arg0: i32) -> (i32, i32) {
    %c0_i32 = arith.constant 0 : i32
    %c0_i32_0 = arith.constant 0 : i32
    %c0_i32_1 = arith.constant 0 : i32
    return %c0_i32, %c0_i32_0 : i32, i32
  }
  func.func @transform_4(%arg0: i32) -> (i32, i32) {
    %c0_i32 = arith.constant 0 : i32
    %c0_i32_0 = arith.constant 0 : i32
    %c0_i32_1 = arith.constant 0 : i32
    return %c0_i32, %c0_i32_0 : i32, i32
  }
  func.func @transform_5(%arg0: i32) -> (i32, i32) {
    %c0_i32 = arith.constant 0 : i32
    %c0_i32_0 = arith.constant 0 : i32
    %c0_i32_1 = arith.constant 0 : i32
    return %c0_i32, %c0_i32_0 : i32, i32
  }
  func.func @transform_6(%arg0: i32) -> (i32, i32) {
    %c0_i32 = arith.constant 0 : i32
    %c0_i32_0 = arith.constant 0 : i32
    %c0_i32_1 = arith.constant 0 : i32
    return %c0_i32, %c0_i32_0 : i32, i32
  }
  func.func @transform_7(%arg0: i32) -> (i32, i32) {
    %c0_i32 = arith.constant 0 : i32
    %c0_i32_0 = arith.constant 0 : i32
    return %arg0, %c0_i32 : i32, i32
  }
}

</mosaic_0001>

<llo_original>
// kernel: custom-call
$region0: #{custom-call}
  %s0 = inlined_call_operand.vmem [shape: c64[8,4], index: 0, kind: input, shape index: {}]
  %s1 = inlined_call_operand.vmem [shape: f32[8,4], index: 1, kind: output, shape index: {}]
  %v2 = vld [vmem:[%s0] sm:$0xff]
  %3 = vst [vmem:[%s1] sm:$0xff] %v2

// kernel: custom-call.1
$region0: #{custom-call.1}
  %s0 = inlined_call_operand.vmem [shape: c64[8,4], index: 0, kind: input, shape index: {}]
  %s1 = inlined_call_operand.vmem [shape: f32[8,4], index: 1, kind: output, shape index: {}]
  %s2 = scalar_lea.vmem %s0, 8
  %v3 = vld [vmem:[%s2] sm:$0xff]
  %4 = vst [vmem:[%s1] sm:$0xff] %v3

// kernel: block_forward.1
$region0: #{block_forward.1}
  #allocation0 [shape = 'u32[]', space=smem, size = 0x4, offset = 0x4, fixed_abs, tag = 'smem constant byte address 0x4 - core index']
  #allocation1 [shape = 'u32[144,128]{1,0:T(1,128)}', space=vmem, size = 0x12000, scoped, tag = 'internal scratch']
  %s0 = inlined_call_operand.vmem [shape: f32[16,32], index: 0, kind: input, shape index: {}]
  %s1 = inlined_call_operand.vmem [shape: f32[8,8], index: 1, kind: input, shape index: {}]
  %s2 = inlined_call_operand.vmem [shape: f32[32,72], index: 2, kind: input, shape index: {}]
  %s3 = inlined_call_operand.vmem [shape: f32[16,64], index: 3, kind: input, shape index: {}]
  %s4 = inlined_call_operand.vmem [shape: f32[32,32], index: 4, kind: input, shape index: {}]
  %s5 = inlined_call_operand.vmem [shape: f32[32,128], index: 5, kind: input, shape index: {}]
  %s6 = inlined_call_operand.vmem [shape: f32[64,32], index: 6, kind: input, shape index: {}]
  %s7 = inlined_call_operand.hbm [shape: f32[16,32], index: 7, kind: output, shape index: {}]
  %s8 = sld [smem:[#allocation0]]
  $region61: #{block_forward.1} parent=0
    _
  %s10 = ssub.s32 1, %s8
  %s11 = scalar_select 0, %s10, %s8
  $region1: #{block_forward.1} parent=0
    #allocation2 [shape = 'u8[8192]{0}', space=vmem, size = 0x2000, scoped, tag = 'output window, operand 0']
    #allocation3 [shape = 's32[2]{0}', space=sflag, size = 0x8, scoped, tag = 'scoped memory for block_forward.1']
    %12 = vsyncpa [#allocation3], 0
    %s13 = scalar_lea.sflag [#allocation3], 1
    %14 = vsyncpa %s13, 0
    loop: start=0, step=1, limit=4
    $region2: #{block_forward.1} parent=1 // loop_pre_header
      _
    $region3: #{block_forward.1} parent=1 // loop_header
      %s16 = sphi 0, %s20
      %p17 = scmp.ge.s32.totalorder %s16, 4
      %s26 = sphi 0, %s28
      %s29 = sphi 0, %s26
      %s30 = sphi 0, %s29
      %s46 = sphi 0, %s30
      %s50 = sphi 0, %s50
      %s52 = sphi 0, %s50
      %s53 = sphi 0, %s52
      %s67 = sphi 0, %s53
      %s71 = sphi 0, %s71
      %s73 = sphi 0, %s71
      %s74 = sphi 0, %s73
      %s88 = sphi 0, %s74
      %s92 = sphi 0, %s92
      %s94 = sphi 0, %s92
      %s95 = sphi 0, %s94
      %s109 = sphi 0, %s95
      %s113 = sphi 0, %s113
      %s115 = sphi 0, %s113
      %s116 = sphi 0, %s115
      %s130 = sphi 0, %s116
      %s134 = sphi 0, %s134
      %s136 = sphi 0, %s134
      %s137 = sphi 0, %s136
      %s151 = sphi 0, %s137
      %s155 = sphi 0, %s155
      %s157 = sphi 0, %s155
      %s158 = sphi 0, %s157
      %s172 = sphi 0, %s158
      %s178 = sphi 0, %s180
      %s181 = sphi 0, %s178
      %s182 = sphi 0, %s181
      %s198 = sphi 0, %s182
    $region4: #{block_forward.1} parent=1 // loop_header_branch
      %19 = sbr.rel (%p17) target = $region8
    $region5: #{block_forward.1} parent=1 // loop_body
      %s21 = ssub.s32 %s16, 1
      %s22 = ssub.s32 %s16, 2
      %s23 = sadd.s32 %s16, 1
      %s24 = ssub.s32 %s16, %s23
      %p25 = scmp.eq.s32.totalorder %s24, 0
      %s27 = sadd.s32 %s26, 1
      %s28 = scalar_select %p25, %s26, %s27
      %p31 = pneg %p25
      %p32 = scmp.eq.s32.totalorder %s16, 1
      %p33 = por %p31, %p32
      %p34 = scmp.ne.s32.totalorder %s26, %s29
      %p35 = scmp.eq.s32.totalorder %s16, 0
      %p36 = por %p34, %p35
      %p37 = scmp.ne.s32.totalorder %s26, %s29
      %p38 = scmp.eq.s32.totalorder %s21, 1
      %p39 = por %p37, %p38
      %p40 = scmp.ne.s32.totalorder %s29, %s30
      %p41 = scmp.eq.s32.totalorder %s21, 0
      %p42 = por %p40, %p41
      %p43 = scmp.ne.s32.totalorder %s29, %s30
      %p44 = scmp.eq.s32.totalorder %s22, 1
      %p45 = por %p43, %p44
      %p47 = scmp.ne.s32.totalorder %s30, %s46
      %p48 = scmp.eq.s32.totalorder %s22, 0
      %p49 = por %p47, %p48
      %s51 = sadd.s32 %s50, 1
      %p54 = scmp.eq.s32.totalorder %s16, 1
      %p55 = scmp.ne.s32.totalorder %s50, %s52
      %p56 = scmp.eq.s32.totalorder %s16, 0
      %p57 = por %p55, %p56
      %p58 = scmp.ne.s32.totalorder %s50, %s52
      %p59 = scmp.eq.s32.totalorder %s21, 1
      %p60 = por %p58, %p59
      %p61 = scmp.ne.s32.totalorder %s52, %s53
      %p62 = scmp.eq.s32.totalorder %s21, 0
      %p63 = por %p61, %p62
      %p64 = scmp.ne.s32.totalorder %s52, %s53
      %p65 = scmp.eq.s32.totalorder %s22, 1
      %p66 = por %p64, %p65
      %p68 = scmp.ne.s32.totalorder %s53, %s67
      %p69 = scmp.eq.s32.totalorder %s22, 0
      %p70 = por %p68, %p69
      %s72 = sadd.s32 %s71, 1
      %p75 = scmp.eq.s32.totalorder %s16, 1
      %p76 = scmp.ne.s32.totalorder %s71, %s73
      %p77 = scmp.eq.s32.totalorder %s16, 0
      %p78 = por %p76, %p77
      %p79 = scmp.ne.s32.totalorder %s71, %s73
      %p80 = scmp.eq.s32.totalorder %s21, 1
      %p81 = por %p79, %p80
      %p82 = scmp.ne.s32.totalorder %s73, %s74
      %p83 = scmp.eq.s32.totalorder %s21, 0
      %p84 = por %p82, %p83
      %p85 = scmp.ne.s32.totalorder %s73, %s74
      %p86 = scmp.eq.s32.totalorder %s22, 1
      %p87 = por %p85, %p86
      %p89 = scmp.ne.s32.totalorder %s74, %s88
      %p90 = scmp.eq.s32.totalorder %s22, 0
      %p91 = por %p89, %p90
      %s93 = sadd.s32 %s92, 1
      %p96 = scmp.eq.s32.totalorder %s16, 1
      %p97 = scmp.ne.s32.totalorder %s92, %s94
      %p98 = scmp.eq.s32.totalorder %s16, 0
      %p99 = por %p97, %p98
      %p100 = scmp.ne.s32.totalorder %s92, %s94
      %p101 = scmp.eq.s32.totalorder %s21, 1
      %p102 = por %p100, %p101
      %p103 = scmp.ne.s32.totalorder %s94, %s95
      %p104 = scmp.eq.s32.totalorder %s21, 0
      %p105 = por %p103, %p104
      %p106 = scmp.ne.s32.totalorder %s94, %s95
      %p107 = scmp.eq.s32.totalorder %s22, 1
      %p108 = por %p106, %p107
      %p110 = scmp.ne.s32.totalorder %s95, %s109
      %p111 = scmp.eq.s32.totalorder %s22, 0
      %p112 = por %p110, %p111
      %s114 = sadd.s32 %s113, 1
      %p117 = scmp.eq.s32.totalorder %s16, 1
      %p118 = scmp.ne.s32.totalorder %s113, %s115
      %p119 = scmp.eq.s32.totalorder %s16, 0
      %p120 = por %p118, %p119
      %p121 = scmp.ne.s32.totalorder %s113, %s115
      %p122 = scmp.eq.s32.totalorder %s21, 1
      %p123 = por %p121, %p122
      %p124 = scmp.ne.s32.totalorder %s115, %s116
      %p125 = scmp.eq.s32.totalorder %s21, 0
      %p126 = por %p124, %p125
      %p127 = scmp.ne.s32.totalorder %s115, %s116
      %p128 = scmp.eq.s32.totalorder %s22, 1
      %p129 = por %p127, %p128
      %p131 = scmp.ne.s32.totalorder %s116, %s130
      %p132 = scmp.eq.s32.totalorder %s22, 0
      %p133 = por %p131, %p132
      %s135 = sadd.s32 %s134, 1
      %p138 = scmp.eq.s32.totalorder %s16, 1
      %p139 = scmp.ne.s32.totalorder %s134, %s136
      %p140 = scmp.eq.s32.totalorder %s16, 0
      %p141 = por %p139, %p140
      %p142 = scmp.ne.s32.totalorder %s134, %s136
      %p143 = scmp.eq.s32.totalorder %s21, 1
      %p144 = por %p142, %p143
      %p145 = scmp.ne.s32.totalorder %s136, %s137
      %p146 = scmp.eq.s32.totalorder %s21, 0
      %p147 = por %p145, %p146
      %p148 = scmp.ne.s32.totalorder %s136, %s137
      %p149 = scmp.eq.s32.totalorder %s22, 1
      %p150 = por %p148, %p149
      %p152 = scmp.ne.s32.totalorder %s137, %s151
      %p153 = scmp.eq.s32.totalorder %s22, 0
      %p154 = por %p152, %p153
      %s156 = sadd.s32 %s155, 1
      %p159 = scmp.eq.s32.totalorder %s16, 1
      %p160 = scmp.ne.s32.totalorder %s155, %s157
      %p161 = scmp.eq.s32.totalorder %s16, 0
      %p162 = por %p160, %p161
      %p163 = scmp.ne.s32.totalorder %s155, %s157
      %p164 = scmp.eq.s32.totalorder %s21, 1
      %p165 = por %p163, %p164
      %p166 = scmp.ne.s32.totalorder %s157, %s158
      %p167 = scmp.eq.s32.totalorder %s21, 0
      %p168 = por %p166, %p167
      %p169 = scmp.ne.s32.totalorder %s157, %s158
      %p170 = scmp.eq.s32.totalorder %s22, 1
      %p171 = por %p169, %p170
      %p173 = scmp.ne.s32.totalorder %s158, %s172
      %p174 = scmp.eq.s32.totalorder %s22, 0
      %p175 = por %p173, %p174
      %s176 = ssub.s32 %s16, %s23
      %p177 = scmp.eq.s32.totalorder %s176, 0
      %s179 = sadd.s32 %s178, 1
      %s180 = scalar_select %p177, %s178, %s179
      %p183 = pneg %p177
      %p184 = scmp.eq.s32.totalorder %s16, 1
      %p185 = por %p183, %p184
      %p186 = scmp.ne.s32.totalorder %s178, %s181
      %p187 = scmp.eq.s32.totalorder %s16, 0
      %p188 = por %p186, %p187
      %p189 = scmp.ne.s32.totalorder %s178, %s181
      %p190 = scmp.eq.s32.totalorder %s21, 1
      %p191 = por %p189, %p190
      %p192 = scmp.ne.s32.totalorder %s181, %s182
      %p193 = scmp.eq.s32.totalorder %s21, 0
      %p194 = por %p192, %p193
      %p195 = scmp.ne.s32.totalorder %s181, %s182
      %p196 = scmp.eq.s32.totalorder %s22, 1
      %p197 = por %p195, %p196
      %p199 = scmp.ne.s32.totalorder %s182, %s198
      %p200 = scmp.eq.s32.totalorder %s22, 0
      %p201 = por %p199, %p200
      %p202 = scmp.le.s32.totalorder 1, %s16
      %p203 = scmp.lt.s32.totalorder %s16, 3
      %p204 = pnand %p202, %p203
      %p205 = pneg %p204
      // Predicated region
      $region9: #{block_forward.1} parent=5 // pred_check
        _
      $region10: #{block_forward.1} parent=5 // pred_check_branch
        %207 = sbr.rel (%p204) target = $region12
      $region11: #{block_forward.1} parent=5 // pred_region
        %s208 = ssub.s32 %s16, 1
        // Predicated region
        $region13: #{block_forward.1} parent=11 // pred_check
          %p209 = pneg %p63
        $region14: #{block_forward.1} parent=11 // pred_check_branch
          %211 = sbr.rel (%p209) target = $region16
        $region15: #{block_forward.1} parent=11 // pred_region
          _
        $region16: #{block_forward.1} parent=11 // pred_fallthru
          _
        // Predicated region
        $region17: #{block_forward.1} parent=11 // pred_check
          %p212 = pneg %p84
        $region18: #{block_forward.1} parent=11 // pred_check_branch
          %214 = sbr.rel (%p212) target = $region20
        $region19: #{block_forward.1} parent=11 // pred_region
          _
        $region20: #{block_forward.1} parent=11 // pred_fallthru
          _
        // Predicated region
        $region21: #{block_forward.1} parent=11 // pred_check
          %p215 = pneg %p105
        $region22: #{block_forward.1} parent=11 // pred_check_branch
          %217 = sbr.rel (%p215) target = $region24
        $region23: #{block_forward.1} parent=11 // pred_region
          _
        $region24: #{block_forward.1} parent=11 // pred_fallthru
          _
        // Predicated region
        $region25: #{block_forward.1} parent=11 // pred_check
          %p218 = pneg %p126
        $region26: #{block_forward.1} parent=11 // pred_check_branch
          %220 = sbr.rel (%p218) target = $region28
        $region27: #{block_forward.1} parent=11 // pred_region
          _
        $region28: #{block_forward.1} parent=11 // pred_fallthru
          _
        // Predicated region
        $region29: #{block_forward.1} parent=11 // pred_check
          %p221 = pneg %p147
        $region30: #{block_forward.1} parent=11 // pred_check_branch
          %223 = sbr.rel (%p221) target = $region32
        $region31: #{block_forward.1} parent=11 // pred_region
          _
        $region32: #{block_forward.1} parent=11 // pred_fallthru
          _
        // Predicated region
        $region33: #{block_forward.1} parent=11 // pred_check
          %p224 = pneg %p168
        $region34: #{block_forward.1} parent=11 // pred_check_branch
          %226 = sbr.rel (%p224) target = $region36
        $region35: #{block_forward.1} parent=11 // pred_region
          _
        $region36: #{block_forward.1} parent=11 // pred_fallthru
          _
      $region12: #{block_forward.1} parent=5 // pred_fallthru
        _
      %p227 = scmp.lt.s32.totalorder %s16, 2
      // Predicated region
      $region37: #{block_forward.1} parent=5 // pred_check
        %p228 = pneg %p227
      $region38: #{block_forward.1} parent=5 // pred_check_branch
        %230 = sbr.rel (%p228) target = $region40
      $region39: #{block_forward.1} parent=5 // pred_region
        // Predicated region
        $region41: #{block_forward.1} parent=39 // pred_check
          %p231 = pneg %p36
        $region42: #{block_forward.1} parent=39 // pred_check_branch
          %233 = sbr.rel (%p231) target = $region44
        $region43: #{block_forward.1} parent=39 // pred_region
          %p234 = scmp.lt.s32.totalorder %s16, 1
          %s235 = scalar_select %p234, %s16, 1
          %s236 = smul.addr %s235, 8
          %s237 = scalar_lea.vmem %s0, %s236
        $region44: #{block_forward.1} parent=39 // pred_fallthru
          _
      $region40: #{block_forward.1} parent=5 // pred_fallthru
        _
      %p238 = scmp.le.s32.totalorder 1, %s16
      %p239 = scmp.lt.s32.totalorder %s16, 3
      %p240 = pnand %p238, %p239
      %p241 = pneg %p240
      // Predicated region
      $region45: #{block_forward.1} parent=5 // pred_check
        _
      $region46: #{block_forward.1} parent=5 // pred_check_branch
        %243 = sbr.rel (%p240) target = $region48
      $region47: #{block_forward.1} parent=5 // pred_region
        %s244 = ssub.s32 %s16, 1
        %p245 = scmp.lt.s32.totalorder %s21, 1
        %s246 = scalar_select %p245, %s21, 1
        %s247 = smul.addr %s246, 8
        %s248 = scalar_lea.vmem %s0, %s247
        %p249 = pneg %p42
        %p250 = pneg %p39
        %p251 = pneg %p63
        %p252 = pneg %p60
        %p253 = pneg %p84
        %p254 = pneg %p81
        %p255 = pneg %p105
        %p256 = pneg %p102
        %p257 = pneg %p126
        %p258 = pneg %p123
        %p259 = pneg %p147
        %p260 = pneg %p144
        %p261 = pneg %p168
        %p262 = pneg %p165
        %p263 = pneg %p194
        %p264 = pneg %p191
        %s265 = sand.u32 %s181, 1
        %s266 = scalar_lea.sflag [#allocation3], %s265
        %s267 = sand.u32 %s181, 1
        %s268 = smul.addr %s267, 8
        %s269 = scalar_lea.vmem [#allocation2], %s268
        %p270 = scmp.lt.s32.totalorder %s21, 1
        %s271 = scalar_select %p270, %s21, 1
        %s272 = smul.addr %s271, 8
        %s273 = scalar_lea.vmem %s0, %s272
        %v274 = vld [vmem:[%s273] sm:$0xff]
        %v275 = vld [vmem:[%s1] sm:$0xff]
        %v276 = vmul.f32 %v274, %v274
        %vm277 = vcmask 261120
        %v278 = vsel %vm277, %v276, 0.0
        %279 = vadd.xlane.f32.xlu0 %v278
        %v280 = vpop.xlane.xlu0 %279
        %v281 = vrcp.pop 32.0
        %v282 = vmul.f32 %v280, %v281
        %v283 = vadd.f32 %v282, 1e-06
        %v284 = vrsqrt.pop %v283
        %v285 = vmul.f32 %v274, %v284
        %v286 = vld [vmem:[%s2] sm:$0xff]
        %v287 = vld [vmem:[%s2 + $0x8] sm:$0xff]
        %v288 = vld [vmem:[%s2 + $0x10] sm:$0xff]
        %v289 = vld [vmem:[%s2 + $0x18] sm:$0xff]
        %v291 = vsel %vm277, %v285, 0
        %293 = vmatprep.subr.mxu0 0.0
        %294 = vmatpush1.msra.mxu0 0.0
        %295 = vmatprep.subr.mxu0 0.0
        %296 = vmatpush1.msra.mxu0 0.0
        %297 = vmatprep.subr.mxu0 0.0
        %298 = vmatpush1.msra.mxu0 0.0
        %299 = vmatprep.subr.mxu0 0.0
        %300 = vmatpush1.msra.mxu0 0.0
        %301 = vmatprep.subr.mxu0 0.0
        %302 = vmatpush1.msra.mxu0 0.0
        %303 = vmatprep.subr.mxu0 0.0
        %304 = vmatpush1.msra.mxu0 0.0
        %305 = vmatprep.subr.mxu0 0.0
        %306 = vmatpush1.msra.mxu0 0.0
        %307 = vmatprep.subr.mxu0 0.0
        %308 = vmatpush1.msra.mxu0 0.0
        %309 = vmatprep.subr.mxu0 0.0
        %310 = vmatpush1.msra.mxu0 0.0
        %311 = vmatprep.subr.mxu0 0.0
        %312 = vmatpush1.msra.mxu0 0.0
        %313 = vmatprep.subr.mxu0 0.0
        %314 = vmatpush1.msra.mxu0 0.0
        %315 = vmatprep.subr.mxu0 0.0
        %316 = vmatpush1.msra.mxu0 0.0
        %317 = vmatprep.subr.mxu0 0.0
        %318 = vmatpush1.msra.mxu0 %v289
        %319 = vmatprep.subr.mxu0 0.0
        %320 = vmatpush1.msra.mxu0 %v288
        %321 = vmatprep.subr.mxu0 0.0
        %322 = vmatpush1.msra.mxu0 %v287
        %323 = vmatprep.subr.mxu0 0.0
        %324 = vmatpush1.msra.mxu0 %v286
        %325 = vmatprep.subr.mxu0 0.0
        %326 = vmatpush2.msra.mxu0 0.0
        %327 = vmatprep.subr.mxu0 0.0
        %328 = vmatpush2.msra.mxu0 0.0
        %329 = vmatprep.subr.mxu0 0.0
        %330 = vmatpush2.msra.mxu0 0.0
        %331 = vmatprep.subr.mxu0 0.0
        %332 = vmatpush2.msra.mxu0 0.0
        %333 = vmatprep.subr.mxu0 0.0
        %334 = vmatpush2.msra.mxu0 0.0
        %335 = vmatprep.subr.mxu0 0.0
        %336 = vmatpush2.msra.mxu0 0.0
        %337 = vmatprep.subr.mxu0 0.0
        %338 = vmatpush2.msra.mxu0 0.0
        %339 = vmatprep.subr.mxu0 0.0
        %340 = vmatpush2.msra.mxu0 0.0
        %341 = vmatprep.subr.mxu0 0.0
        %342 = vmatpush2.msra.mxu0 0.0
        %343 = vmatprep.subr.mxu0 0.0
        %344 = vmatpush2.msra.mxu0 0.0
        %345 = vmatprep.subr.mxu0 0.0
        %346 = vmatpush2.msra.mxu0 0.0
        %347 = vmatprep.subr.mxu0 0.0
        %348 = vmatpush2.msra.mxu0 0.0
        %349 = vmatprep.subr.mxu0 0.0
        %350 = vmatpush2.msra.mxu0 0.0
        %351 = vmatprep.subr.mxu0 0.0
        %352 = vmatpush2.msra.mxu0 0.0
        %353 = vmatprep.subr.mxu0 0.0
        %354 = vmatpush2.msra.mxu0 0.0
        %355 = vmatprep.subr.mxu0 0.0
        %356 = vmatpush2.msra.mxu0 0.0
        %357 = vmatprep.mubr.f32.mxu0 0.0
        %358 = vmatmul.mubr.f32.gmra.mxu0 %v291
        %v359 = vpop.f32.mrf.mxu0
        %v360 = vadd.f32 0.0, %v359
        %v361 = vpop.f32.mrf.mxu0
        %362 = vdwg.mxu0
        %364 = vrot.lane.b32.xlu0 %v275, 64
        %v365 = vpop.permute.xlu0 %364
        %v367 = vmul.f32 %v360, %v365
        %369 = vrot.lane.b32.xlu0 %v367, 124
        %v370 = vpop.permute.xlu0 %369
        %v372 = vsub.f32 %v367, %v370
        %373 = vrot.lane.b32.xlu0 %v275, 60
        %v374 = vpop.permute.xlu0 %373
        %v376 = vmul.f32 %v360, %v374
        %377 = vrot.lane.b32.xlu0 %v275, 68
        %v378 = vpop.permute.xlu0 %377
        %v380 = vmul.f32 %v360, %v378
        %382 = vrot.lane.b32.xlu0 %v380, 124
        %v383 = vpop.permute.xlu0 %382
        %v385 = vadd.f32 %v376, %v383
        %v386 = vmul.f32 %v360, %v360
        %388 = vrot.lane.b32.xlu0 %v386, 80
        %v389 = vpop.permute.xlu0 %388
        %vm391 = vcmask 130048
        %v392 = vsel %vm391, %v389, 0.0
        %393 = vadd.xlane.f32.xlu0 %v392
        %v394 = vpop.xlane.xlu0 %393
        %v395 = vrcp.pop 16.0
        %v396 = vmul.f32 %v394, %v395
        %v397 = vadd.f32 %v396, 1e-06
        %v398 = vrsqrt.pop %v397
        %v399 = vmul.f32 %v360, %v398
        %v400 = vld [vmem:[%s3] sm:$0xff]
        %v401 = vld [vmem:[%s3 + $0x8] sm:$0xff]
        %403 = vrot.lane.b32.xlu0 %v399, 80
        %v404 = vpop.permute.xlu0 %403
        %v405 = vsel %vm391, %v404, 0
        %407 = vmatprep.subr.mxu0 0.0
        %408 = vmatpush1.msra.mxu0 0.0
        %409 = vmatprep.subr.mxu0 0.0
        %410 = vmatpush1.msra.mxu0 0.0
        %411 = vmatprep.subr.mxu0 0.0
        %412 = vmatpush1.msra.mxu0 0.0
        %413 = vmatprep.subr.mxu0 0.0
        %414 = vmatpush1.msra.mxu0 0.0
        %415 = vmatprep.subr.mxu0 0.0
        %416 = vmatpush1.msra.mxu0 0.0
        %417 = vmatprep.subr.mxu0 0.0
        %418 = vmatpush1.msra.mxu0 0.0
        %419 = vmatprep.subr.mxu0 0.0
        %420 = vmatpush1.msra.mxu0 0.0
        %421 = vmatprep.subr.mxu0 0.0
        %422 = vmatpush1.msra.mxu0 0.0
        %423 = vmatprep.subr.mxu0 0.0
        %424 = vmatpush1.msra.mxu0 0.0
        %425 = vmatprep.subr.mxu0 0.0
        %426 = vmatpush1.msra.mxu0 0.0
        %427 = vmatprep.subr.mxu0 0.0
        %428 = vmatpush1.msra.mxu0 0.0
        %429 = vmatprep.subr.mxu0 0.0
        %430 = vmatpush1.msra.mxu0 0.0
        %431 = vmatprep.subr.mxu0 0.0
        %432 = vmatpush1.msra.mxu0 0.0
        %433 = vmatprep.subr.mxu0 0.0
        %434 = vmatpush1.msra.mxu0 0.0
        %435 = vmatprep.subr.mxu0 0.0
        %436 = vmatpush1.msra.mxu0 %v401
        %437 = vmatprep.subr.mxu0 0.0
        %438 = vmatpush1.msra.mxu0 %v400
        %439 = vmatprep.subr.mxu0 0.0
        %440 = vmatpush2.msra.mxu0 0.0
        %441 = vmatprep.subr.mxu0 0.0
        %442 = vmatpush2.msra.mxu0 0.0
        %443 = vmatprep.subr.mxu0 0.0
        %444 = vmatpush2.msra.mxu0 0.0
        %445 = vmatprep.subr.mxu0 0.0
        %446 = vmatpush2.msra.mxu0 0.0
        %447 = vmatprep.subr.mxu0 0.0
        %448 = vmatpush2.msra.mxu0 0.0
        %449 = vmatprep.subr.mxu0 0.0
        %450 = vmatpush2.msra.mxu0 0.0
        %451 = vmatprep.subr.mxu0 0.0
        %452 = vmatpush2.msra.mxu0 0.0
        %453 = vmatprep.subr.mxu0 0.0
        %454 = vmatpush2.msra.mxu0 0.0
        %455 = vmatprep.subr.mxu0 0.0
        %456 = vmatpush2.msra.mxu0 0.0
        %457 = vmatprep.subr.mxu0 0.0
        %458 = vmatpush2.msra.mxu0 0.0
        %459 = vmatprep.subr.mxu0 0.0
        %460 = vmatpush2.msra.mxu0 0.0
        %461 = vmatprep.subr.mxu0 0.0
        %462 = vmatpush2.msra.mxu0 0.0
        %463 = vmatprep.subr.mxu0 0.0
        %464 = vmatpush2.msra.mxu0 0.0
        %465 = vmatprep.subr.mxu0 0.0
        %466 = vmatpush2.msra.mxu0 0.0
        %467 = vmatprep.subr.mxu0 0.0
        %468 = vmatpush2.msra.mxu0 0.0
        %469 = vmatprep.subr.mxu0 0.0
        %470 = vmatpush2.msra.mxu0 0.0
        %471 = vmatprep.mubr.f32.mxu0 0.0
        %472 = vmatmul.mubr.f32.gmra.mxu0 %v405
        %v473 = vpop.f32.mrf.mxu0
        %v474 = vadd.f32 0.0, %v473
        %v475 = vpop.f32.mrf.mxu0
        %476 = vdwg.mxu0
        %v477 = vlaneseq
        %v478 = vshrl.u32 %v477, 7
        %v479 = vlaneseq
        %v480 = vand.u32 %v479, 127
        %vm481 = vcmp.le.s32.totalorder %v480, %v478
        %482 = vrot.lane.b32.xlu0 %v275, 16
        %v483 = vpop.permute.xlu0 %482
        %v485 = vmul.f32 %v360, %v483
        %487 = vrot.lane.b32.xlu0 %v485, 124
        %v488 = vpop.permute.xlu0 %487
        %v490 = vsub.f32 %v485, %v488
        %491 = vrot.lane.b32.xlu0 %v275, 12
        %v492 = vpop.permute.xlu0 %491
        %v494 = vmul.f32 %v360, %v492
        %495 = vrot.lane.b32.xlu0 %v275, 20
        %v496 = vpop.permute.xlu0 %495
        %v498 = vmul.f32 %v360, %v496
        %500 = vrot.lane.b32.xlu0 %v498, 124
        %v501 = vpop.permute.xlu0 %500
        %v503 = vadd.f32 %v494, %v501
        %505 = vrot.lane.b32.xlu0 %v503, 4
        %v506 = vpop.permute.xlu0 %505
        %v508 = vsel %vm391, %v360, %v490
        %vm509 = vcmask 162816
        %v510 = vsel %vm509, %v508, %v506
        %512 = vrot.lane.b32.xlu0 %v372, 80
        %v513 = vpop.permute.xlu0 %512
        %516 = vrot.lane.b32.xlu0 %v385, 84
        %v517 = vpop.permute.xlu0 %516
        %v519 = vsel %vm391, %v474, %v513
        %v520 = vsel %vm509, %v519, %v517
        %vm521 = vcmask 195584
        %v523 = vsel %vm521, %v510, 0
        %v526 = vsel %vm521, %v520, 0
        %528 = vmatprep.subr.mxu0 0.0
        %529 = vmatpush1.xpose.msra.mxu0 0.0
        %530 = vmatprep.subr.mxu0 0.0
        %531 = vmatpush1.xpose.msra.mxu0 0.0
        %532 = vmatprep.subr.mxu0 0.0
        %533 = vmatpush1.xpose.msra.mxu0 0.0
        %534 = vmatprep.subr.mxu0 0.0
        %535 = vmatpush1.xpose.msra.mxu0 0.0
        %536 = vmatprep.subr.mxu0 0.0
        %537 = vmatpush1.xpose.msra.mxu0 0.0
        %538 = vmatprep.subr.mxu0 0.0
        %539 = vmatpush1.xpose.msra.mxu0 0.0
        %540 = vmatprep.subr.mxu0 0.0
        %541 = vmatpush1.xpose.msra.mxu0 0.0
        %542 = vmatprep.subr.mxu0 0.0
        %543 = vmatpush1.xpose.msra.mxu0 0.0
        %544 = vmatprep.subr.mxu0 0.0
        %545 = vmatpush1.xpose.msra.mxu0 0.0
        %546 = vmatprep.subr.mxu0 0.0
        %547 = vmatpush1.xpose.msra.mxu0 0.0
        %548 = vmatprep.subr.mxu0 0.0
        %549 = vmatpush1.xpose.msra.mxu0 0.0
        %550 = vmatprep.subr.mxu0 0.0
        %551 = vmatpush1.xpose.msra.mxu0 0.0
        %552 = vmatprep.subr.mxu0 0.0
        %553 = vmatpush1.xpose.msra.mxu0 0.0
        %554 = vmatprep.subr.mxu0 0.0
        %555 = vmatpush1.xpose.msra.mxu0 0.0
        %556 = vmatprep.subr.mxu0 0.0
        %557 = vmatpush1.xpose.msra.mxu0 0.0
        %558 = vmatprep.subr.mxu0 0.0
        %559 = vmatpush1.xpose.msra.mxu0 %v526
        %560 = vmatprep.subr.mxu0 0.0
        %561 = vmatpush2.xpose.msra.mxu0 0.0
        %562 = vmatprep.subr.mxu0 0.0
        %563 = vmatpush2.xpose.msra.mxu0 0.0
        %564 = vmatprep.subr.mxu0 0.0
        %565 = vmatpush2.xpose.msra.mxu0 0.0
        %566 = vmatprep.subr.mxu0 0.0
        %567 = vmatpush2.xpose.msra.mxu0 0.0
        %568 = vmatprep.subr.mxu0 0.0
        %569 = vmatpush2.xpose.msra.mxu0 0.0
        %570 = vmatprep.subr.mxu0 0.0
        %571 = vmatpush2.xpose.msra.mxu0 0.0
        %572 = vmatprep.subr.mxu0 0.0
        %573 = vmatpush2.xpose.msra.mxu0 0.0
        %574 = vmatprep.subr.mxu0 0.0
        %575 = vmatpush2.xpose.msra.mxu0 0.0
        %576 = vmatprep.subr.mxu0 0.0
        %577 = vmatpush2.xpose.msra.mxu0 0.0
        %578 = vmatprep.subr.mxu0 0.0
        %579 = vmatpush2.xpose.msra.mxu0 0.0
        %580 = vmatprep.subr.mxu0 0.0
        %581 = vmatpush2.xpose.msra.mxu0 0.0
        %582 = vmatprep.subr.mxu0 0.0
        %583 = vmatpush2.xpose.msra.mxu0 0.0
        %584 = vmatprep.subr.mxu0 0.0
        %585 = vmatpush2.xpose.msra.mxu0 0.0
        %586 = vmatprep.subr.mxu0 0.0
        %587 = vmatpush2.xpose.msra.mxu0 0.0
        %588 = vmatprep.subr.mxu0 0.0
        %589 = vmatpush2.xpose.msra.mxu0 0.0
        %590 = vmatprep.subr.mxu0 0.0
        %591 = vmatpush2.xpose.msra.mxu0 0.0
        %592 = vmatprep.mubr.f32.mxu0 0.0
        %593 = vmatmul.mubr.f32.gmra.mxu0 %v523
        %v594 = vpop.f32.mrf.mxu0
        %v595 = vadd.f32 0.0, %v594
        %v596 = vpop.f32.mrf.mxu0
        %597 = vdwg.mxu0
        %v598 = vsel %vm481, %v595, -1e+30
        %vm599 = vcmask 64512
        %v600 = vsel %vm599, %v598, -inf
        %601 = vmax.xlane.f32.xlu0 %v600
        %v602 = vpop.xlane.xlu0 %601
        %v603 = vsub.f32 %v598, %v602
        %v604 = vmul.f32 %v603, 1.442695
        %v605 = vpow.pop %v604
        %v606 = vsel %vm599, %v605, 0.0
        %607 = vadd.xlane.f32.xlu0 %v606
        %v608 = vpop.xlane.xlu0 %607
        %v609 = vrcp.pop %v608
        %v610 = vmul.f32 %v605, %v609
        %612 = vrot.lane.b32.xlu0 %v474, 112
        %v613 = vpop.permute.xlu0 %612
        %v616 = vsel %vm599, %v610, 0
        %618 = vmatprep.subr.mxu0 0.0
        %619 = vmatpush1.msra.mxu0 0.0
        %620 = vmatprep.subr.mxu0 0.0
        %621 = vmatpush1.msra.mxu0 0.0
        %622 = vmatprep.subr.mxu0 0.0
        %623 = vmatpush1.msra.mxu0 0.0
        %624 = vmatprep.subr.mxu0 0.0
        %625 = vmatpush1.msra.mxu0 0.0
        %626 = vmatprep.subr.mxu0 0.0
        %627 = vmatpush1.msra.mxu0 0.0
        %628 = vmatprep.subr.mxu0 0.0
        %629 = vmatpush1.msra.mxu0 0.0
        %630 = vmatprep.subr.mxu0 0.0
        %631 = vmatpush1.msra.mxu0 0.0
        %632 = vmatprep.subr.mxu0 0.0
        %633 = vmatpush1.msra.mxu0 0.0
        %634 = vmatprep.subr.mxu0 0.0
        %635 = vmatpush1.msra.mxu0 0.0
        %636 = vmatprep.subr.mxu0 0.0
        %637 = vmatpush1.msra.mxu0 0.0
        %638 = vmatprep.subr.mxu0 0.0
        %639 = vmatpush1.msra.mxu0 0.0
        %640 = vmatprep.subr.mxu0 0.0
        %641 = vmatpush1.msra.mxu0 0.0
        %642 = vmatprep.subr.mxu0 0.0
        %643 = vmatpush1.msra.mxu0 0.0
        %644 = vmatprep.subr.mxu0 0.0
        %645 = vmatpush1.msra.mxu0 0.0
        %646 = vmatprep.subr.mxu0 0.0
        %647 = vmatpush1.msra.mxu0 0.0
        %648 = vmatprep.subr.mxu0 0.0
        %649 = vmatpush1.msra.mxu0 %v613
        %650 = vmatprep.subr.mxu0 0.0
        %651 = vmatpush2.msra.mxu0 0.0
        %652 = vmatprep.subr.mxu0 0.0
        %653 = vmatpush2.msra.mxu0 0.0
        %654 = vmatprep.subr.mxu0 0.0
        %655 = vmatpush2.msra.mxu0 0.0
        %656 = vmatprep.subr.mxu0 0.0
        %657 = vmatpush2.msra.mxu0 0.0
        %658 = vmatprep.subr.mxu0 0.0
        %659 = vmatpush2.msra.mxu0 0.0
        %660 = vmatprep.subr.mxu0 0.0
        %661 = vmatpush2.msra.mxu0 0.0
        %662 = vmatprep.subr.mxu0 0.0
        %663 = vmatpush2.msra.mxu0 0.0
        %664 = vmatprep.subr.mxu0 0.0
        %665 = vmatpush2.msra.mxu0 0.0
        %666 = vmatprep.subr.mxu0 0.0
        %667 = vmatpush2.msra.mxu0 0.0
        %668 = vmatprep.subr.mxu0 0.0
        %669 = vmatpush2.msra.mxu0 0.0
        %670 = vmatprep.subr.mxu0 0.0
        %671 = vmatpush2.msra.mxu0 0.0
        %672 = vmatprep.subr.mxu0 0.0
        %673 = vmatpush2.msra.mxu0 0.0
        %674 = vmatprep.subr.mxu0 0.0
        %675 = vmatpush2.msra.mxu0 0.0
        %676 = vmatprep.subr.mxu0 0.0
        %677 = vmatpush2.msra.mxu0 0.0
        %678 = vmatprep.subr.mxu0 0.0
        %679 = vmatpush2.msra.mxu0 0.0
        %680 = vmatprep.subr.mxu0 0.0
        %681 = vmatpush2.msra.mxu0 0.0
        %682 = vmatprep.mubr.f32.mxu0 0.0
        %683 = vmatmul.mubr.f32.gmra.mxu0 %v616
        %v684 = vpop.f32.mrf.mxu0
        %v685 = vadd.f32 0.0, %v684
        %v686 = vpop.f32.mrf.mxu0
        %687 = vdwg.mxu0
        %688 = vrot.lane.b32.xlu0 %v275, 40
        %v689 = vpop.permute.xlu0 %688
        %v691 = vmul.f32 %v360, %v689
        %693 = vrot.lane.b32.xlu0 %v691, 124
        %v694 = vpop.permute.xlu0 %693
        %v696 = vsub.f32 %v691, %v694
        %697 = vrot.lane.b32.xlu0 %v275, 36
        %v698 = vpop.permute.xlu0 %697
        %v700 = vmul.f32 %v360, %v698
        %701 = vrot.lane.b32.xlu0 %v275, 44
        %v702 = vpop.permute.xlu0 %701
        %v704 = vmul.f32 %v360, %v702
        %706 = vrot.lane.b32.xlu0 %v704, 124
        %v707 = vpop.permute.xlu0 %706
        %v709 = vadd.f32 %v700, %v707
        %711 = vrot.lane.b32.xlu0 %v360, 104
        %v712 = vpop.permute.xlu0 %711
        %715 = vrot.lane.b32.xlu0 %v696, 104
        %v716 = vpop.permute.xlu0 %715
        %719 = vrot.lane.b32.xlu0 %v709, 108
        %v720 = vpop.permute.xlu0 %719
        %v722 = vsel %vm391, %v712, %v716
        %v723 = vsel %vm509, %v722, %v720
        %724 = vrot.lane.b32.xlu0 %v474, 96
        %v725 = vpop.permute.xlu0 %724
        %v727 = vsel %vm391, %v725, %v513
        %v728 = vsel %vm509, %v727, %v517
        %v730 = vsel %vm521, %v723, 0
        %v733 = vsel %vm521, %v728, 0
        %735 = vmatprep.subr.mxu0 0.0
        %736 = vmatpush1.xpose.msra.mxu0 0.0
        %737 = vmatprep.subr.mxu0 0.0
        %738 = vmatpush1.xpose.msra.mxu0 0.0
        %739 = vmatprep.subr.mxu0 0.0
        %740 = vmatpush1.xpose.msra.mxu0 0.0
        %741 = vmatprep.subr.mxu0 0.0
        %742 = vmatpush1.xpose.msra.mxu0 0.0
        %743 = vmatprep.subr.mxu0 0.0
        %744 = vmatpush1.xpose.msra.mxu0 0.0
        %745 = vmatprep.subr.mxu0 0.0
        %746 = vmatpush1.xpose.msra.mxu0 0.0
        %747 = vmatprep.subr.mxu0 0.0
        %748 = vmatpush1.xpose.msra.mxu0 0.0
        %749 = vmatprep.subr.mxu0 0.0
        %750 = vmatpush1.xpose.msra.mxu0 0.0
        %751 = vmatprep.subr.mxu0 0.0
        %752 = vmatpush1.xpose.msra.mxu0 0.0
        %753 = vmatprep.subr.mxu0 0.0
        %754 = vmatpush1.xpose.msra.mxu0 0.0
        %755 = vmatprep.subr.mxu0 0.0
        %756 = vmatpush1.xpose.msra.mxu0 0.0
        %757 = vmatprep.subr.mxu0 0.0
        %758 = vmatpush1.xpose.msra.mxu0 0.0
        %759 = vmatprep.subr.mxu0 0.0
        %760 = vmatpush1.xpose.msra.mxu0 0.0
        %761 = vmatprep.subr.mxu0 0.0
        %762 = vmatpush1.xpose.msra.mxu0 0.0
        %763 = vmatprep.subr.mxu0 0.0
        %764 = vmatpush1.xpose.msra.mxu0 0.0
        %765 = vmatprep.subr.mxu0 0.0
        %766 = vmatpush1.xpose.msra.mxu0 %v733
        %767 = vmatprep.subr.mxu0 0.0
        %768 = vmatpush2.xpose.msra.mxu0 0.0
        %769 = vmatprep.subr.mxu0 0.0
        %770 = vmatpush2.xpose.msra.mxu0 0.0
        %771 = vmatprep.subr.mxu0 0.0
        %772 = vmatpush2.xpose.msra.mxu0 0.0
        %773 = vmatprep.subr.mxu0 0.0
        %774 = vmatpush2.xpose.msra.mxu0 0.0
        %775 = vmatprep.subr.mxu0 0.0
        %776 = vmatpush2.xpose.msra.mxu0 0.0
        %777 = vmatprep.subr.mxu0 0.0
        %778 = vmatpush2.xpose.msra.mxu0 0.0
        %779 = vmatprep.subr.mxu0 0.0
        %780 = vmatpush2.xpose.msra.mxu0 0.0
        %781 = vmatprep.subr.mxu0 0.0
        %782 = vmatpush2.xpose.msra.mxu0 0.0
        %783 = vmatprep.subr.mxu0 0.0
        %784 = vmatpush2.xpose.msra.mxu0 0.0
        %785 = vmatprep.subr.mxu0 0.0
        %786 = vmatpush2.xpose.msra.mxu0 0.0
        %787 = vmatprep.subr.mxu0 0.0
        %788 = vmatpush2.xpose.msra.mxu0 0.0
        %789 = vmatprep.subr.mxu0 0.0
        %790 = vmatpush2.xpose.msra.mxu0 0.0
        %791 = vmatprep.subr.mxu0 0.0
        %792 = vmatpush2.xpose.msra.mxu0 0.0
        %793 = vmatprep.subr.mxu0 0.0
        %794 = vmatpush2.xpose.msra.mxu0 0.0
        %795 = vmatprep.subr.mxu0 0.0
        %796 = vmatpush2.xpose.msra.mxu0 0.0
        %797 = vmatprep.subr.mxu0 0.0
        %798 = vmatpush2.xpose.msra.mxu0 0.0
        %799 = vmatprep.mubr.f32.mxu0 0.0
        %800 = vmatmul.mubr.f32.gmra.mxu0 %v730
        %v801 = vpop.f32.mrf.mxu0
        %v802 = vadd.f32 0.0, %v801
        %v803 = vpop.f32.mrf.mxu0
        %804 = vdwg.mxu0
        %v805 = vsel %vm481, %v802, -1e+30
        %v806 = vsel %vm599, %v805, -inf
        %807 = vmax.xlane.f32.xlu0 %v806
        %v808 = vpop.xlane.xlu0 %807
        %v809 = vsub.f32 %v805, %v808
        %v810 = vmul.f32 %v809, 1.442695
        %v811 = vpow.pop %v810
        %v812 = vsel %vm599, %v811, 0.0
        %813 = vadd.xlane.f32.xlu0 %v812
        %v814 = vpop.xlane.xlu0 %813
        %v815 = vrcp.pop %v814
        %v816 = vmul.f32 %v811, %v815
        %817 = vrot.lane.b32.xlu0 %v474, 80
        %v818 = vpop.permute.xlu0 %817
        %v821 = vsel %vm599, %v816, 0
        %823 = vmatprep.subr.mxu0 0.0
        %824 = vmatpush1.msra.mxu0 0.0
        %825 = vmatprep.subr.mxu0 0.0
        %826 = vmatpush1.msra.mxu0 0.0
        %827 = vmatprep.subr.mxu0 0.0
        %828 = vmatpush1.msra.mxu0 0.0
        %829 = vmatprep.subr.mxu0 0.0
        %830 = vmatpush1.msra.mxu0 0.0
        %831 = vmatprep.subr.mxu0 0.0
        %832 = vmatpush1.msra.mxu0 0.0
        %833 = vmatprep.subr.mxu0 0.0
        %834 = vmatpush1.msra.mxu0 0.0
        %835 = vmatprep.subr.mxu0 0.0
        %836 = vmatpush1.msra.mxu0 0.0
        %837 = vmatprep.subr.mxu0 0.0
        %838 = vmatpush1.msra.mxu0 0.0
        %839 = vmatprep.subr.mxu0 0.0
        %840 = vmatpush1.msra.mxu0 0.0
        %841 = vmatprep.subr.mxu0 0.0
        %842 = vmatpush1.msra.mxu0 0.0
        %843 = vmatprep.subr.mxu0 0.0
        %844 = vmatpush1.msra.mxu0 0.0
        %845 = vmatprep.subr.mxu0 0.0
        %846 = vmatpush1.msra.mxu0 0.0
        %847 = vmatprep.subr.mxu0 0.0
        %848 = vmatpush1.msra.mxu0 0.0
        %849 = vmatprep.subr.mxu0 0.0
        %850 = vmatpush1.msra.mxu0 0.0
        %851 = vmatprep.subr.mxu0 0.0
        %852 = vmatpush1.msra.mxu0 0.0
        %853 = vmatprep.subr.mxu0 0.0
        %854 = vmatpush1.msra.mxu0 %v818
        %855 = vmatprep.subr.mxu0 0.0
        %856 = vmatpush2.msra.mxu0 0.0
        %857 = vmatprep.subr.mxu0 0.0
        %858 = vmatpush2.msra.mxu0 0.0
        %859 = vmatprep.subr.mxu0 0.0
        %860 = vmatpush2.msra.mxu0 0.0
        %861 = vmatprep.subr.mxu0 0.0
        %862 = vmatpush2.msra.mxu0 0.0
        %863 = vmatprep.subr.mxu0 0.0
        %864 = vmatpush2.msra.mxu0 0.0
        %865 = vmatprep.subr.mxu0 0.0
        %866 = vmatpush2.msra.mxu0 0.0
        %867 = vmatprep.subr.mxu0 0.0
        %868 = vmatpush2.msra.mxu0 0.0
        %869 = vmatprep.subr.mxu0 0.0
        %870 = vmatpush2.msra.mxu0 0.0
        %871 = vmatprep.subr.mxu0 0.0
        %872 = vmatpush2.msra.mxu0 0.0
        %873 = vmatprep.subr.mxu0 0.0
        %874 = vmatpush2.msra.mxu0 0.0
        %875 = vmatprep.subr.mxu0 0.0
        %876 = vmatpush2.msra.mxu0 0.0
        %877 = vmatprep.subr.mxu0 0.0
        %878 = vmatpush2.msra.mxu0 0.0
        %879 = vmatprep.subr.mxu0 0.0
        %880 = vmatpush2.msra.mxu0 0.0
        %881 = vmatprep.subr.mxu0 0.0
        %882 = vmatpush2.msra.mxu0 0.0
        %883 = vmatprep.subr.mxu0 0.0
        %884 = vmatpush2.msra.mxu0 0.0
        %885 = vmatprep.subr.mxu0 0.0
        %886 = vmatpush2.msra.mxu0 0.0
        %887 = vmatprep.mubr.f32.mxu0 0.0
        %888 = vmatmul.mubr.f32.gmra.mxu0 %v821
        %v889 = vpop.f32.mrf.mxu0
        %v890 = vadd.f32 0.0, %v889
        %v891 = vpop.f32.mrf.mxu0
        %892 = vdwg.mxu0
        %894 = vrot.lane.b32.xlu0 %v890, 16
        %v895 = vpop.permute.xlu0 %894
        %v897 = vsel %vm391, %v685, %v895
        %v898 = vld [vmem:[%s4] sm:$0xff]
        %v899 = vld [vmem:[%s4 + $0x8] sm:$0xff]
        %v900 = vld [vmem:[%s4 + $0x10] sm:$0xff]
        %v901 = vld [vmem:[%s4 + $0x18] sm:$0xff]
        %v903 = vsel %vm277, %v897, 0
        %905 = vmatprep.subr.mxu0 0.0
        %906 = vmatpush1.msra.mxu0 0.0
        %907 = vmatprep.subr.mxu0 0.0
        %908 = vmatpush1.msra.mxu0 0.0
        %909 = vmatprep.subr.mxu0 0.0
        %910 = vmatpush1.msra.mxu0 0.0
        %911 = vmatprep.subr.mxu0 0.0
        %912 = vmatpush1.msra.mxu0 0.0
        %913 = vmatprep.subr.mxu0 0.0
        %914 = vmatpush1.msra.mxu0 0.0
        %915 = vmatprep.subr.mxu0 0.0
        %916 = vmatpush1.msra.mxu0 0.0
        %917 = vmatprep.subr.mxu0 0.0
        %918 = vmatpush1.msra.mxu0 0.0
        %919 = vmatprep.subr.mxu0 0.0
        %920 = vmatpush1.msra.mxu0 0.0
        %921 = vmatprep.subr.mxu0 0.0
        %922 = vmatpush1.msra.mxu0 0.0
        %923 = vmatprep.subr.mxu0 0.0
        %924 = vmatpush1.msra.mxu0 0.0
        %925 = vmatprep.subr.mxu0 0.0
        %926 = vmatpush1.msra.mxu0 0.0
        %927 = vmatprep.subr.mxu0 0.0
        %928 = vmatpush1.msra.mxu0 0.0
        %929 = vmatprep.subr.mxu0 0.0
        %930 = vmatpush1.msra.mxu0 %v901
        %931 = vmatprep.subr.mxu0 0.0
        %932 = vmatpush1.msra.mxu0 %v900
        %933 = vmatprep.subr.mxu0 0.0
        %934 = vmatpush1.msra.mxu0 %v899
        %935 = vmatprep.subr.mxu0 0.0
        %936 = vmatpush1.msra.mxu0 %v898
        %937 = vmatprep.subr.mxu0 0.0
        %938 = vmatpush2.msra.mxu0 0.0
        %939 = vmatprep.subr.mxu0 0.0
        %940 = vmatpush2.msra.mxu0 0.0
        %941 = vmatprep.subr.mxu0 0.0
        %942 = vmatpush2.msra.mxu0 0.0
        %943 = vmatprep.subr.mxu0 0.0
        %944 = vmatpush2.msra.mxu0 0.0
        %945 = vmatprep.subr.mxu0 0.0
        %946 = vmatpush2.msra.mxu0 0.0
        %947 = vmatprep.subr.mxu0 0.0
        %948 = vmatpush2.msra.mxu0 0.0
        %949 = vmatprep.subr.mxu0 0.0
        %950 = vmatpush2.msra.mxu0 0.0
        %951 = vmatprep.subr.mxu0 0.0
        %952 = vmatpush2.msra.mxu0 0.0
        %953 = vmatprep.subr.mxu0 0.0
        %954 = vmatpush2.msra.mxu0 0.0
        %955 = vmatprep.subr.mxu0 0.0
        %956 = vmatpush2.msra.mxu0 0.0
        %957 = vmatprep.subr.mxu0 0.0
        %958 = vmatpush2.msra.mxu0 0.0
        %959 = vmatprep.subr.mxu0 0.0
        %960 = vmatpush2.msra.mxu0 0.0
        %961 = vmatprep.subr.mxu0 0.0
        %962 = vmatpush2.msra.mxu0 0.0
        %963 = vmatprep.subr.mxu0 0.0
        %964 = vmatpush2.msra.mxu0 0.0
        %965 = vmatprep.subr.mxu0 0.0
        %966 = vmatpush2.msra.mxu0 0.0
        %967 = vmatprep.subr.mxu0 0.0
        %968 = vmatpush2.msra.mxu0 0.0
        %969 = vmatprep.mubr.f32.mxu0 0.0
        %970 = vmatmul.mubr.f32.gmra.mxu0 %v903
        %v971 = vpop.f32.mrf.mxu0
        %v972 = vadd.f32 0.0, %v971
        %v973 = vpop.f32.mrf.mxu0
        %974 = vdwg.mxu0
        %v975 = vadd.f32 %v274, %v972
        %v976 = vmul.f32 %v975, %v975
        %v977 = vsel %vm277, %v976, 0.0
        %978 = vadd.xlane.f32.xlu0 %v977
        %v979 = vpop.xlane.xlu0 %978
        %v980 = vmul.f32 %v979, %v281
        %v981 = vadd.f32 %v980, 1e-06
        %v982 = vrsqrt.pop %v981
        %v983 = vmul.f32 %v975, %v982
        %v984 = vld [vmem:[%s5] sm:$0xff]
        %v985 = vld [vmem:[%s5 + $0x8] sm:$0xff]
        %v986 = vld [vmem:[%s5 + $0x10] sm:$0xff]
        %v987 = vld [vmem:[%s5 + $0x18] sm:$0xff]
        %v989 = vsel %vm277, %v983, 0
        %991 = vmatprep.subr.mxu0 0.0
        %992 = vmatpush1.msra.mxu0 0.0
        %993 = vmatprep.subr.mxu0 0.0
        %994 = vmatpush1.msra.mxu0 0.0
        %995 = vmatprep.subr.mxu0 0.0
        %996 = vmatpush1.msra.mxu0 0.0
        %997 = vmatprep.subr.mxu0 0.0
        %998 = vmatpush1.msra.mxu0 0.0
        %999 = vmatprep.subr.mxu0 0.0
        %1000 = vmatpush1.msra.mxu0 0.0
        %1001 = vmatprep.subr.mxu0 0.0
        %1002 = vmatpush1.msra.mxu0 0.0
        %1003 = vmatprep.subr.mxu0 0.0
        %1004 = vmatpush1.msra.mxu0 0.0
        %1005 = vmatprep.subr.mxu0 0.0
        %1006 = vmatpush1.msra.mxu0 0.0
        %1007 = vmatprep.subr.mxu0 0.0
        %1008 = vmatpush1.msra.mxu0 0.0
        %1009 = vmatprep.subr.mxu0 0.0
        %1010 = vmatpush1.msra.mxu0 0.0
        %1011 = vmatprep.subr.mxu0 0.0
        %1012 = vmatpush1.msra.mxu0 0.0
        %1013 = vmatprep.subr.mxu0 0.0
        %1014 = vmatpush1.msra.mxu0 0.0
        %1015 = vmatprep.subr.mxu0 0.0
        %1016 = vmatpush1.msra.mxu0 %v987
        %1017 = vmatprep.subr.mxu0 0.0
        %1018 = vmatpush1.msra.mxu0 %v986
        %1019 = vmatprep.subr.mxu0 0.0
        %1020 = vmatpush1.msra.mxu0 %v985
        %1021 = vmatprep.subr.mxu0 0.0
        %1022 = vmatpush1.msra.mxu0 %v984
        %1023 = vmatprep.subr.mxu0 0.0
        %1024 = vmatpush2.msra.mxu0 0.0
        %1025 = vmatprep.subr.mxu0 0.0
        %1026 = vmatpush2.msra.mxu0 0.0
        %1027 = vmatprep.subr.mxu0 0.0
        %1028 = vmatpush2.msra.mxu0 0.0
        %1029 = vmatprep.subr.mxu0 0.0
        %1030 = vmatpush2.msra.mxu0 0.0
        %1031 = vmatprep.subr.mxu0 0.0
        %1032 = vmatpush2.msra.mxu0 0.0
        %1033 = vmatprep.subr.mxu0 0.0
        %1034 = vmatpush2.msra.mxu0 0.0
        %1035 = vmatprep.subr.mxu0 0.0
        %1036 = vmatpush2.msra.mxu0 0.0
        %1037 = vmatprep.subr.mxu0 0.0
        %1038 = vmatpush2.msra.mxu0 0.0
        %1039 = vmatprep.subr.mxu0 0.0
        %1040 = vmatpush2.msra.mxu0 0.0
        %1041 = vmatprep.subr.mxu0 0.0
        %1042 = vmatpush2.msra.mxu0 0.0
        %1043 = vmatprep.subr.mxu0 0.0
        %1044 = vmatpush2.msra.mxu0 0.0
        %1045 = vmatprep.subr.mxu0 0.0
        %1046 = vmatpush2.msra.mxu0 0.0
        %1047 = vmatprep.subr.mxu0 0.0
        %1048 = vmatpush2.msra.mxu0 0.0
        %1049 = vmatprep.subr.mxu0 0.0
        %1050 = vmatpush2.msra.mxu0 0.0
        %1051 = vmatprep.subr.mxu0 0.0
        %1052 = vmatpush2.msra.mxu0 0.0
        %1053 = vmatprep.subr.mxu0 0.0
        %1054 = vmatpush2.msra.mxu0 0.0
        %1055 = vmatprep.mubr.f32.mxu0 0.0
        %1056 = vmatmul.mubr.f32.gmra.mxu0 %v989
        %v1057 = vpop.f32.mrf.mxu0
        %v1058 = vadd.f32 0.0, %v1057
        %v1059 = vpop.f32.mrf.mxu0
        %1060 = vdwg.mxu0
        %v1061 = vxor.u32 %v1058, 2147483648
        %v1062 = vmul.f32 %v1061, 1.442695
        %v1063 = vpow.pop %v1062
        %v1064 = vadd.f32 %v1063, 1.0
        %v1065 = vrcp.pop %v1064
        %v1066 = vmul.f32 1.0, %v1065
        %v1067 = vmul.f32 %v1058, %v1066
        %1069 = vrot.lane.b32.xlu0 %v1058, 64
        %v1070 = vpop.permute.xlu0 %1069
        %v1072 = vmul.f32 %v1067, %v1070
        %v1073 = vld [vmem:[%s6] sm:$0xff]
        %v1074 = vld [vmem:[%s6 + $0x8] sm:$0xff]
        %v1075 = vld [vmem:[%s6 + $0x10] sm:$0xff]
        %v1076 = vld [vmem:[%s6 + $0x18] sm:$0xff]
        %v1077 = vld [vmem:[%s6 + $0x20] sm:$0xff]
        %v1078 = vld [vmem:[%s6 + $0x28] sm:$0xff]
        %v1079 = vld [vmem:[%s6 + $0x30] sm:$0xff]
        %v1080 = vld [vmem:[%s6 + $0x38] sm:$0xff]
        %vm1081 = vcmask 523264
        %v1083 = vsel %vm1081, %v1072, 0
        %1085 = vmatprep.subr.mxu0 0.0
        %1086 = vmatpush1.msra.mxu0 0.0
        %1087 = vmatprep.subr.mxu0 0.0
        %1088 = vmatpush1.msra.mxu0 0.0
        %1089 = vmatprep.subr.mxu0 0.0
        %1090 = vmatpush1.msra.mxu0 0.0
        %1091 = vmatprep.subr.mxu0 0.0
        %1092 = vmatpush1.msra.mxu0 0.0
        %1093 = vmatprep.subr.mxu0 0.0
        %1094 = vmatpush1.msra.mxu0 0.0
        %1095 = vmatprep.subr.mxu0 0.0
        %1096 = vmatpush1.msra.mxu0 0.0
        %1097 = vmatprep.subr.mxu0 0.0
        %1098 = vmatpush1.msra.mxu0 0.0
        %1099 = vmatprep.subr.mxu0 0.0
        %1100 = vmatpush1.msra.mxu0 0.0
        %1101 = vmatprep.subr.mxu0 0.0
        %1102 = vmatpush1.msra.mxu0 %v1080
        %1103 = vmatprep.subr.mxu0 0.0
        %1104 = vmatpush1.msra.mxu0 %v1079
        %1105 = vmatprep.subr.mxu0 0.0
        %1106 = vmatpush1.msra.mxu0 %v1078
        %1107 = vmatprep.subr.mxu0 0.0
        %1108 = vmatpush1.msra.mxu0 %v1077
        %1109 = vmatprep.subr.mxu0 0.0
        %1110 = vmatpush1.msra.mxu0 %v1076
        %1111 = vmatprep.subr.mxu0 0.0
        %1112 = vmatpush1.msra.mxu0 %v1075
        %1113 = vmatprep.subr.mxu0 0.0
        %1114 = vmatpush1.msra.mxu0 %v1074
        %1115 = vmatprep.subr.mxu0 0.0
        %1116 = vmatpush1.msra.mxu0 %v1073
        %1117 = vmatprep.subr.mxu0 0.0
        %1118 = vmatpush2.msra.mxu0 0.0
        %1119 = vmatprep.subr.mxu0 0.0
        %1120 = vmatpush2.msra.mxu0 0.0
        %1121 = vmatprep.subr.mxu0 0.0
        %1122 = vmatpush2.msra.mxu0 0.0
        %1123 = vmatprep.subr.mxu0 0.0
        %1124 = vmatpush2.msra.mxu0 0.0
        %1125 = vmatprep.subr.mxu0 0.0
        %1126 = vmatpush2.msra.mxu0 0.0
        %1127 = vmatprep.subr.mxu0 0.0
        %1128 = vmatpush2.msra.mxu0 0.0
        %1129 = vmatprep.subr.mxu0 0.0
        %1130 = vmatpush2.msra.mxu0 0.0
        %1131 = vmatprep.subr.mxu0 0.0
        %1132 = vmatpush2.msra.mxu0 0.0
        %1133 = vmatprep.subr.mxu0 0.0
        %1134 = vmatpush2.msra.mxu0 0.0
        %1135 = vmatprep.subr.mxu0 0.0
        %1136 = vmatpush2.msra.mxu0 0.0
        %1137 = vmatprep.subr.mxu0 0.0
        %1138 = vmatpush2.msra.mxu0 0.0
        %1139 = vmatprep.subr.mxu0 0.0
        %1140 = vmatpush2.msra.mxu0 0.0
        %1141 = vmatprep.subr.mxu0 0.0
        %1142 = vmatpush2.msra.mxu0 0.0
        %1143 = vmatprep.subr.mxu0 0.0
        %1144 = vmatpush2.msra.mxu0 0.0
        %1145 = vmatprep.subr.mxu0 0.0
        %1146 = vmatpush2.msra.mxu0 0.0
        %1147 = vmatprep.subr.mxu0 0.0
        %1148 = vmatpush2.msra.mxu0 0.0
        %1149 = vmatprep.mubr.f32.mxu0 0.0
        %1150 = vmatmul.mubr.f32.gmra.mxu0 %v1083
        %v1151 = vpop.f32.mrf.mxu0
        %v1152 = vadd.f32 0.0, %v1151
        %v1153 = vpop.f32.mrf.mxu0
        %1154 = vdwg.mxu0
        %v1155 = vadd.f32 %v975, %v1152
        %1156 = vst.msk [vmem:[%s269] sm:$0xff] %vm277, %v1155
        %s1157 = sand.u32 %s181, 1
        %s1158 = scalar_lea.sflag [#allocation3], %s1157
        %s1159 = sand.u32 %s181, 1
        %s1160 = smul.addr %s1159, 8
        %s1161 = scalar_lea.vmem [#allocation2], %s1160
        // Predicated region
        $region49: #{block_forward.1} parent=47 // pred_check
          %p1162 = pneg %p191
        $region50: #{block_forward.1} parent=47 // pred_check_branch
          %1164 = sbr.rel (%p1162) target = $region52
        $region51: #{block_forward.1} parent=47 // pred_region
          %s1166 = ssub.s32 128, 128
          %1167 = vsyncadd %s1158, %s1166
          %s1168 = smul.addr %s21, 128
          %s1169 = scalar_lea.hbm %s7, %s1168
          %s1171 = sshll.u32 %s1161, 4
          %s1172 = int_to_ptr.vmem [resolvable:$true] %s1171
          %1174 = dma.vmem_to_hbm [thread:$0]  %s1172, 128, %s1169, %s1158
        $region52: #{block_forward.1} parent=47 // pred_fallthru
          _
      $region48: #{block_forward.1} parent=5 // pred_fallthru
        _
      %p1175 = scmp.le.s32.totalorder 2, %s16
      // Predicated region
      $region53: #{block_forward.1} parent=5 // pred_check
        %p1176 = pneg %p1175
      $region54: #{block_forward.1} parent=5 // pred_check_branch
        %1178 = sbr.rel (%p1176) target = $region56
      $region55: #{block_forward.1} parent=5 // pred_region
        %s1179 = ssub.s32 %s16, 2
        // Predicated region
        $region57: #{block_forward.1} parent=55 // pred_check
          %p1180 = pneg %p197
        $region58: #{block_forward.1} parent=55 // pred_check_branch
          %1182 = sbr.rel (%p1180) target = $region60
        $region59: #{block_forward.1} parent=55 // pred_region
          %s1183 = sand.u32 %s182, 1
          %s1184 = scalar_lea.sflag [#allocation3], %s1183
          %s1185 = sand.u32 %s182, 1
          %s1186 = smul.addr %s1185, 8
          %s1187 = scalar_lea.vmem [#allocation2], %s1186
          %1188 = dma.done %s1184, 128
        $region60: #{block_forward.1} parent=55 // pred_fallthru
          _
      $region56: #{block_forward.1} parent=5 // pred_fallthru
        _
    $region6: #{block_forward.1} parent=1 // loop_footer
      %s20 = sadd.s32 1, %s16
    $region7: #{block_forward.1} parent=1 // loop_footer_branch
      %15 = sbr.rel target = $region3
    $region8: #{block_forward.1} parent=1 // loop_exit
      _
    %1189 = vsyncpa [#allocation3], 1
    %s1190 = scalar_lea.sflag [#allocation3], 1
    %1191 = vsyncpa %s1190, 1

</llo_original>
